<compile_context>
chip_gen: v7x
topology: tpu7x:2x2x1
jax: 0.10.0
libtpu: 0.0.40
codegen_flags: <defaults>
</compile_context>

<pallas_src>
import functools

import jax
import jax.numpy as jnp
from jax import lax
from jax.experimental import pallas as pl
from jax.experimental.pallas import tpu as pltpu

MEAN = 0.1307
SIGMA = 0.3081
INV_SIGMA = 1.0 / SIGMA

_LANE = 128     # lane width: all feature dims padded to a multiple of this
_TM_MAX = 512   # max rows per grid block (sweepable 512-1024 on v5e/v6e)


def _round_up(x, m):
    return (x + m - 1) // m * m


def _cdiv(a, b):
    return -(-a // b)


def _row_tile(rows):
    """Row-block size: multiple of 16 (bf16 sublane pack), >=2 grid steps when
    rows > 16 (two TensorCores on v7x), padding waste < one block."""
    rows = max(rows, 1)
    if rows <= 16:
        return 16
    n_blocks = max(2, _cdiv(rows, _TM_MAX))
    return _round_up(_cdiv(rows, n_blocks), 16)


def _pad2d(a, rows, cols):
    r, c = a.shape
    return jnp.pad(a, ((0, rows - r), (0, cols - c)))


def _vmem_limit(buffer_bytes):
    """Explicit scoped-VMEM request: double-buffered blocks x 2 safety margin."""
    return int(min(max(4 * buffer_bytes + (2 << 20), 8 << 20), 64 << 20))


# ----------------------------------------------------------------------------
# Kernels
# ----------------------------------------------------------------------------
def _mm_bias_sigmoid_kernel(x_ref, w_ref, b_ref, o_ref):
    acc = jnp.dot(x_ref[...], w_ref[...], preferred_element_type=jnp.float32)
    acc = acc + b_ref[...]
    o_ref[...] = jax.nn.sigmoid(acc).astype(o_ref.dtype)


def _dense_chain_kernel(n_layers, x_ref, *refs):
    out_ref = refs[-1]
    params = refs[:-1]
    h = x_ref[...]
    for i in range(n_layers):
        w = params[2 * i][...]          # bf16 (Kp, Np), VMEM-resident
        bias = params[2 * i + 1][...]   # f32  (1, Np)
        h = jnp.dot(h.astype(jnp.bfloat16), w,
                    preferred_element_type=jnp.float32) + bias
        if i + 1 < n_layers:
            h = jax.nn.sigmoid(h)
        # nn.Dropout (when present) is an eval-mode identity.
    out_ref[...] = h.astype(out_ref.dtype)


# ----------------------------------------------------------------------------
# Row-tiled matmul + bias + sigmoid (used by the conv layers)
# ----------------------------------------------------------------------------
def _matmul_bias_sigmoid(x, w, b):
    """(rows, Kp) @ (Kp, Np) + bias, sigmoid.  Kp/Np already lane-padded."""
    rows, k = x.shape
    n = w.shape[1]
    tm = _row_tile(rows)
    rp = _round_up(rows, tm)
    xp = _pad2d(x, rp, k).astype(jnp.bfloat16)
    buf_bytes = tm * k * 2 + k * n * 2 + n * 4 + tm * n * 2
    out = pl.pallas_call(
        _mm_bias_sigmoid_kernel,
        out_shape=jax.ShapeDtypeStruct((rp, n), jnp.bfloat16),
        grid=(rp // tm,),
        in_specs=[
            pl.BlockSpec((tm, k), lambda i: (i, 0)),
            pl.BlockSpec((k, n), lambda i: (0, 0)),   # weights VMEM-resident
            pl.BlockSpec((1, n), lambda i: (0, 0)),
        ],
        out_specs=pl.BlockSpec((tm, n), lambda i: (i, 0)),
        compiler_params=pltpu.CompilerParams(
            dimension_semantics=("parallel",),
            vmem_limit_bytes=_vmem_limit(buf_bytes)),
        cost_estimate=pl.CostEstimate(
            flops=2 * rp * k * n, transcendentals=rp * n,
            bytes_accessed=rp * k * 2 + k * n * 2 + n * 4 + rp * n * 2),
    )(xp, w, b)
    return out[:rows]


# ----------------------------------------------------------------------------
# Conv2d + Sigmoid in NHWC (no transposes; prepared weights; Pallas matmul)
# ----------------------------------------------------------------------------
def conv2d_sigmoid_nhwc(x, layer):
    """x: (B, H, W, C) NHWC -> sigmoid(conv2d(x)) as (B, OH, OW, O) bf16."""
    kh, kw, s, p = layer["kh"], layer["kw"], layer["stride"], layer["padding"]
    b_, h_, w_, c_ = x.shape
    oh = (h_ - kh + 2 * p) // s + 1
    ow = (w_ - kw + 2 * p) // s + 1
    # Spatial pad: first layer pads with MEAN (== 0 in the normalized domain,
    # because normalization is folded into this layer's weights/bias).
    xp = jnp.pad(x, ((0, 0), (p, p), (p, p), (0, 0)),
                 constant_values=layer["pad_value"])
    cols = [xp[:, dy:dy + (oh - 1) * s + 1:s, dx:dx + (ow - 1) * s + 1:s, :]
            for dy in range(kh) for dx in range(kw)]
    patches = jnp.concatenate(cols, axis=-1)                  # (B, OH, OW, kh*kw*C)
    patches = patches.reshape(b_ * oh * ow, kh * kw * c_)      # no transpose
    patches = _pad2d(patches, patches.shape[0], layer["w"].shape[0])
    y = _matmul_bias_sigmoid(patches, layer["w"], layer["b"])  # (rows, Np) bf16
    oc = layer["out_channels"]
    return y[:, :oc].reshape(b_, oh, ow, oc)                   # stay NHWC


# ----------------------------------------------------------------------------
# Fused FC chain: all Linear (+Sigmoid) layers in ONE Pallas kernel.
# ----------------------------------------------------------------------------
def fc_chain(x2d, fc_layers):
    """x2d: (B, K_real); fc_layers: prepared dicts with padded bf16 w, f32 b."""
    bsz, _ = x2d.shape
    kp = fc_layers[0]["w"].shape[0]
    tm = _row_tile(bsz)
    bp = _round_up(bsz, tm)
    xm = _pad2d(x2d, bp, kp).astype(jnp.bfloat16)

    flat_params = []
    in_specs = [pl.BlockSpec((tm, kp), lambda i: (i, 0))]
    flops, transc, byts = 0, 0, bp * kp * 2
    buf_bytes = tm * kp * 2
    k_in = kp
    for li, layer in enumerate(fc_layers):
        w, b = layer["w"], layer["b"]
        flat_params += [w, b]
        in_specs += [pl.BlockSpec(w.shape, lambda i: (0, 0)),
                     pl.BlockSpec(b.shape, lambda i: (0, 0))]
        n_out = w.shape[1]
        flops += 2 * bp * k_in * n_out
        if li + 1 < len(fc_layers):
            transc += bp * n_out
        byts += w.size * 2 + b.size * 4
        buf_bytes += w.size * 2 + b.size * 4
        k_in = n_out
    n_last = k_in
    byts += bp * n_last * 4
    buf_bytes += tm * n_last * 4

    kernel = functools.partial(_dense_chain_kernel, len(fc_layers))
    out = pl.pallas_call(
        kernel,
        out_shape=jax.ShapeDtypeStruct((bp, n_last), jnp.float32),
        grid=(bp // tm,),
        in_specs=in_specs,
        out_specs=pl.BlockSpec((tm, n_last), lambda i: (i, 0)),
        compiler_params=pltpu.CompilerParams(
            dimension_semantics=("parallel",),
            vmem_limit_bytes=_vmem_limit(buf_bytes)),
        cost_estimate=pl.CostEstimate(
            flops=flops, transcendentals=transc, bytes_accessed=byts),
    )(xm, *flat_params)
    return out[:bsz, :fc_layers[-1]["out_features"]]


# ----------------------------------------------------------------------------
# One-time parameter preparation (normalization fold, NHWC reorder, pad, cast)
# ----------------------------------------------------------------------------
def prepare_params(conv_params, conv_cfg, fc_params, input_size):
    prepared_conv = []
    prev_c, img = 1, input_size
    for idx, ((w, b), cfg) in enumerate(zip(conv_params, conv_cfg)):
        o, i_c, kh, kw = w.shape
        _, _, s, p = cfg
        w = w.astype(jnp.float32)
        b = b.astype(jnp.float32)
        if idx == 0:
            # (x - mu)/sigma folded into the first conv:
            #   w' = w / sigma ; b' = b - mu * sum(w')
            w = w * INV_SIGMA
            b = b - MEAN * jnp.sum(w, axis=(1, 2, 3))
        wk = jnp.transpose(w, (2, 3, 1, 0)).reshape(kh * kw * i_c, o)  # (dy,dx,c) rows
        kp = _round_up(kh * kw * i_c, _LANE)
        np_ = _round_up(o, _LANE)
        prepared_conv.append(dict(
            w=_pad2d(wk, kp, np_).astype(jnp.bfloat16),
            b=_pad2d(b.reshape(1, o), 1, np_).astype(jnp.float32),
            kh=kh, kw=kw, stride=s, padding=p, out_channels=o,
            pad_value=(MEAN if idx == 0 else 0.0)))
        prev_c = o
        img = (img - kh + 2 * p) // s + 1

    prepared_fc = []
    for idx, (w, b) in enumerate(fc_params):
        w = w.astype(jnp.float32)
        b = b.astype(jnp.float32)
        k_real, n_real = w.shape
        if idx == 0:
            if conv_cfg:
                # permute rows from PyTorch CHW flatten order to NHWC order
                w = w.reshape(prev_c, img, img, n_real)
                w = jnp.transpose(w, (1, 2, 0, 3)).reshape(k_real, n_real)
            else:
                # no convs: fold normalization into the first Linear instead
                w = w * INV_SIGMA
                b = b - MEAN * jnp.sum(w, axis=0)
        kp = _round_up(k_real, _LANE)
        np_ = _round_up(n_real, _LANE)
        prepared_fc.append(dict(
            w=_pad2d(w, kp, np_).astype(jnp.bfloat16),
            b=_pad2d(b.reshape(1, n_real), 1, np_).astype(jnp.float32),
            out_features=n_real))
    return dict(conv=prepared_conv, fc=prepared_fc)


# ----------------------------------------------------------------------------
# Full module forward
# ----------------------------------------------------------------------------
def conv_forward(x, prepared):
    """Forward of `Conv` on raw NCHW input (normalization folded into weights)."""
    if prepared["conv"]:
        h = jnp.transpose(x, (0, 2, 3, 1))          # one tiny NCHW->NHWC on input
        for layer in prepared["conv"]:
            h = conv2d_sigmoid_nhwc(h, layer)       # Pallas matmul+bias+sigmoid
        h2 = h.reshape(h.shape[0], -1)              # NHWC flatten (FC1 pre-permuted)
    else:
        h2 = x.reshape(x.shape[0], -1)              # nn.Flatten
    return fc_chain(h2, prepared["fc"])             # single fused Pallas FC kernel


# ----------------------------------------------------------------------------
# Parameter construction + pure-JAX reference (PyTorch semantics)
# ----------------------------------------------------------------------------
def init_params(key, input_size, conv_cfg, fc_sizes):
    conv_params = []
    prev_c, img = 1, input_size
    for n_ch, k, s, p in conv_cfg:
        key, kw_, kb_ = jax.random.split(key, 3)
        bound = 1.0 / ((prev_c * k * k) ** 0.5)
        w = jax.random.uniform(kw_, (n_ch, prev_c, k, k), jnp.float32, -bound, bound)
        b = jax.random.uniform(kb_, (n_ch,), jnp.float32, -bound, bound)
        conv_params.append((w, b))
        prev_c = n_ch
        img = (img - k + 2 * p) // s + 1
    fc_params = []
    prev = prev_c * img * img
    for n in fc_sizes:
        key, kw_, kb_ = jax.random.split(key, 3)
        bound = 1.0 / (prev ** 0.5)
        w = jax.random.uniform(kw_, (prev, n), jnp.float32, -bound, bound)
        b = jax.random.uniform(kb_, (n,), jnp.float32, -bound, bound)
        fc_params.append((w, b))
        prev = n
    return conv_params, fc_params


def conv_reference(x, conv_params, conv_cfg, fc_params):
    h = (x - MEAN) / SIGMA
    for (w, b), (_, _, s, p) in zip(conv_params, conv_cfg):
        h = lax.conv_general_dilated(
            h, w, (s, s), [(p, p), (p, p)],
            dimension_numbers=("NCHW", "OIHW", "NCHW"))
        h = jax.nn.sigmoid(h + b.reshape(1, -1, 1, 1))
    h = h.reshape(h.shape[0], -1)
    for i, (w, b) in enumerate(fc_params):
        h = h @ w + b
        if i + 1 < len(fc_params):
            h = jax.nn.sigmoid(h)
    return h


if __name__ == "__main__":
    key = jax.random.PRNGKey(0)
    key, kx = jax.random.split(key)
    input_size = 28
    x = jax.random.uniform(kx, (2, 1, input_size, input_size), jnp.float32)

    # Config 1: two conv layers + two fc layers (ConvSmall-style).
    conv_cfg = [(16, 4, 2, 1), (32, 4, 2, 1)]
    fc_sizes = [100, 10]
    conv_p, fc_p = init_params(key, input_size, conv_cfg, fc_sizes)
    prepared = prepare_params(conv_p, conv_cfg, fc_p, input_size)   # one-time prep
    fwd = jax.jit(lambda xx: conv_forward(xx, prepared))
    out = jax.block_until_ready(fwd(x))
    ref = conv_reference(x, conv_p, conv_cfg, fc_p)
    assert out.shape == (2, 10), out.shape
    err = float(jnp.max(jnp.abs(out - ref)))
    assert err < 5e-2, err   # bf16 matmul tolerance

    # Config 2: no conv layers (Normalization + Flatten + MLP, fold into FC1).
    conv_cfg2, fc_sizes2 = [], [100, 100, 10]
    conv_p2, fc_p2 = init_params(key, input_size, conv_cfg2, fc_sizes2)
    prepared2 = prepare_params(conv_p2, conv_cfg2, fc_p2, input_size)
    fwd2 = jax.jit(lambda xx: conv_forward(xx, prepared2))
    out2 = jax.block_until_ready(fwd2(x))
    ref2 = conv_reference(x, conv_p2, conv_cfg2, fc_p2)
    assert out2.shape == (2, 10), out2.shape
    err2 = float(jnp.max(jnp.abs(out2 - ref2)))
    assert err2 < 5e-2, err2

    print("KERNEL_OK")
</pallas_src>

<mosaic_0001>
module attributes {stable_mosaic.version = 11 : i64} {
  func.func @_mm_bias_sigmoid_kernel(%arg0: i32, %arg1: memref<208x128xbf16, #tpu.memory_space<vmem>>, %arg2: memref<128x128xbf16, #tpu.memory_space<vmem>>, %arg3: memref<1x128xf32, #tpu.memory_space<vmem>>, %arg4: memref<208x128xbf16, #tpu.memory_space<vmem>>) attributes {dimension_semantics = [#tpu.dimension_semantics<parallel>], iteration_bounds = array<i64: 2>, scalar_prefetch = 0 : i64, scratch_operands = 0 : i64, tpu.core_type = #tpu.core_type<tc>, window_params = [{transform_indices = @transform_0, window_bounds = array<i64: 208, 128>}, {pipeline_mode = #tpu.pipeline_mode<synchronous>, transform_indices = @transform_1, window_bounds = array<i64: 128, 128>}, {pipeline_mode = #tpu.pipeline_mode<synchronous>, transform_indices = @transform_2, window_bounds = array<i64: 1, 128>}, {transform_indices = @transform_3, window_bounds = array<i64: 208, 128>}]} {
    %c0 = arith.constant 0 : index
    %c0_0 = arith.constant 0 : index
    %0 = vector.load %arg1[%c0, %c0_0] : memref<208x128xbf16, #tpu.memory_space<vmem>>, vector<208x128xbf16>
    %c0_1 = arith.constant 0 : index
    %c0_2 = arith.constant 0 : index
    %1 = vector.load %arg2[%c0_1, %c0_2] : memref<128x128xbf16, #tpu.memory_space<vmem>>, vector<128x128xbf16>
    %cst = arith.constant dense<0.000000e+00> : vector<208x128xf32>
    %2 = tpu.matmul %0, %1, %cst {dimension_numbers = #tpu.dot_dimension_numbers<[1], [0], [0], [1], [0, 0, 1, 1], [], []>} : vector<208x128xbf16>, vector<128x128xbf16>, vector<208x128xf32> -> vector<208x128xf32>
    %c0_3 = arith.constant 0 : index
    %c0_4 = arith.constant 0 : index
    %3 = vector.load %arg3[%c0_3, %c0_4] : memref<1x128xf32, #tpu.memory_space<vmem>>, vector<1x128xf32>
    %4 = vector.broadcast %3 : vector<1x128xf32> to vector<208x128xf32>
    %5 = arith.addf %2, %4 : vector<208x128xf32>
    %6 = arith.negf %5 : vector<208x128xf32>
    %7 = math.exp %6 : vector<208x128xf32>
    %cst_5 = arith.constant 1.000000e+00 : f32
    %8 = vector.broadcast %cst_5 : f32 to vector<208x128xf32>
    %9 = arith.addf %8, %7 : vector<208x128xf32>
    %10 = arith.divf %8, %9 : vector<208x128xf32>
    %11 = arith.truncf %10 : vector<208x128xf32> to vector<208x128xbf16>
    %c0_6 = arith.constant 0 : index
    %c0_7 = arith.constant 0 : index
    %12 = vector.load %arg4[%c0_6, %c0_7] : memref<208x128xbf16, #tpu.memory_space<vmem>>, vector<208x128xbf16>
    tpu.vector_store %arg4[%c0_6, %c0_7], %11 {strides = array<i32>} : memref<208x128xbf16, #tpu.memory_space<vmem>>, vector<208x128xbf16>,
    return
  }
  func.func @transform_0(%arg0: i32) -> (i32, i32) {
    %c0_i32 = arith.constant 0 : i32
    %c0_i32_0 = arith.constant 0 : i32
    return %arg0, %c0_i32 : i32, i32
  }
  func.func @transform_1(%arg0: i32) -> (i32, i32) {
    %c0_i32 = arith.constant 0 : i32
    %c0_i32_0 = arith.constant 0 : i32
    %c0_i32_1 = arith.constant 0 : i32
    return %c0_i32, %c0_i32_0 : i32, i32
  }
  func.func @transform_2(%arg0: i32) -> (i32, i32) {
    %c0_i32 = arith.constant 0 : i32
    %c0_i32_0 = arith.constant 0 : i32
    %c0_i32_1 = arith.constant 0 : i32
    return %c0_i32, %c0_i32_0 : i32, i32
  }
  func.func @transform_3(%arg0: i32) -> (i32, i32) {
    %c0_i32 = arith.constant 0 : i32
    %c0_i32_0 = arith.constant 0 : i32
    return %arg0, %c0_i32 : i32, i32
  }
}

module attributes {stable_mosaic.version = 11 : i64} {
  func.func @_dense_chain_kernel(%arg0: i32, %arg1: memref<16x1664xbf16, #tpu.memory_space<vmem>>, %arg2: memref<1664x128xbf16, #tpu.memory_space<vmem>>, %arg3: memref<1x128xf32, #tpu.memory_space<vmem>>, %arg4: memref<128x128xbf16, #tpu.memory_space<vmem>>, %arg5: memref<1x128xf32, #tpu.memory_space<vmem>>, %arg6: memref<16x128xf32, #tpu.memory_space<vmem>>) attributes {dimension_semantics = [#tpu.dimension_semantics<parallel>], iteration_bounds = array<i64: 1>, scalar_prefetch = 0 : i64, scratch_operands = 0 : i64, tpu.core_type = #tpu.core_type<tc>, window_params = [{transform_indices = @transform_0, window_bounds = array<i64: 16, 1664>}, {pipeline_mode = #tpu.pipeline_mode<synchronous>, transform_indices = @transform_1, window_bounds = array<i64: 1664, 128>}, {pipeline_mode = #tpu.pipeline_mode<synchronous>, transform_indices = @transform_2, window_bounds = array<i64: 1, 128>}, {pipeline_mode = #tpu.pipeline_mode<synchronous>, transform_indices = @transform_3, window_bounds = array<i64: 128, 128>}, {pipeline_mode = #tpu.pipeline_mode<synchronous>, transform_indices = @transform_4, window_bounds = array<i64: 1, 128>}, {transform_indices = @transform_5, window_bounds = array<i64: 16, 128>}]} {
    %c0 = arith.constant 0 : index
    %c0_0 = arith.constant 0 : index
    %0 = vector.load %arg1[%c0, %c0_0] : memref<16x1664xbf16, #tpu.memory_space<vmem>>, vector<16x1664xbf16>
    %c0_1 = arith.constant 0 : index
    %c0_2 = arith.constant 0 : index
    %1 = vector.load %arg2[%c0_1, %c0_2] : memref<1664x128xbf16, #tpu.memory_space<vmem>>, vector<1664x128xbf16>
    %c0_3 = arith.constant 0 : index
    %c0_4 = arith.constant 0 : index
    %2 = vector.load %arg3[%c0_3, %c0_4] : memref<1x128xf32, #tpu.memory_space<vmem>>, vector<1x128xf32>
    %cst = arith.constant dense<0.000000e+00> : vector<16x128xf32>
    %3 = tpu.matmul %0, %1, %cst {dimension_numbers = #tpu.dot_dimension_numbers<[1], [0], [0], [1], [0, 0, 1, 1], [], []>} : vector<16x1664xbf16>, vector<1664x128xbf16>, vector<16x128xf32> -> vector<16x128xf32>
    %4 = vector.broadcast %2 : vector<1x128xf32> to vector<16x128xf32>
    %5 = arith.addf %3, %4 : vector<16x128xf32>
    %6 = arith.negf %5 : vector<16x128xf32>
    %7 = math.exp %6 : vector<16x128xf32>
    %cst_5 = arith.constant 1.000000e+00 : f32
    %8 = vector.broadcast %cst_5 : f32 to vector<16x128xf32>
    %9 = arith.addf %8, %7 : vector<16x128xf32>
    %10 = arith.divf %8, %9 : vector<16x128xf32>
    %c0_6 = arith.constant 0 : index
    %c0_7 = arith.constant 0 : index
    %11 = vector.load %arg4[%c0_6, %c0_7] : memref<128x128xbf16, #tpu.memory_space<vmem>>, vector<128x128xbf16>
    %c0_8 = arith.constant 0 : index
    %c0_9 = arith.constant 0 : index
    %12 = vector.load %arg5[%c0_8, %c0_9] : memref<1x128xf32, #tpu.memory_space<vmem>>, vector<1x128xf32>
    %13 = arith.truncf %10 : vector<16x128xf32> to vector<16x128xbf16>
    %cst_10 = arith.constant dense<0.000000e+00> : vector<16x128xf32>
    %14 = tpu.matmul %13, %11, %cst_10 {dimension_numbers = #tpu.dot_dimension_numbers<[1], [0], [0], [1], [0, 0, 1, 1], [], []>} : vector<16x128xbf16>, vector<128x128xbf16>, vector<16x128xf32> -> vector<16x128xf32>
    %15 = vector.broadcast %12 : vector<1x128xf32> to vector<16x128xf32>
    %16 = arith.addf %14, %15 : vector<16x128xf32>
    %c0_11 = arith.constant 0 : index
    %c0_12 = arith.constant 0 : index
    %17 = vector.load %arg6[%c0_11, %c0_12] : memref<16x128xf32, #tpu.memory_space<vmem>>, vector<16x128xf32>
    tpu.vector_store %arg6[%c0_11, %c0_12], %16 {strides = array<i32>} : memref<16x128xf32, #tpu.memory_space<vmem>>, vector<16x128xf32>,
    return
  }
  func.func @transform_0(%arg0: i32) -> (i32, i32) {
    %c0_i32 = arith.constant 0 : i32
    %c0_i32_0 = arith.constant 0 : i32
    return %arg0, %c0_i32 : i32, i32
  }
  func.func @transform_1(%arg0: i32) -> (i32, i32) {
    %c0_i32 = arith.constant 0 : i32
    %c0_i32_0 = arith.constant 0 : i32
    %c0_i32_1 = arith.constant 0 : i32
    return %c0_i32, %c0_i32_0 : i32, i32
  }
  func.func @transform_2(%arg0: i32) -> (i32, i32) {
    %c0_i32 = arith.constant 0 : i32
    %c0_i32_0 = arith.constant 0 : i32
    %c0_i32_1 = arith.constant 0 : i32
    return %c0_i32, %c0_i32_0 : i32, i32
  }
  func.func @transform_3(%arg0: i32) -> (i32, i32) {
    %c0_i32 = arith.constant 0 : i32
    %c0_i32_0 = arith.constant 0 : i32
    %c0_i32_1 = arith.constant 0 : i32
    return %c0_i32, %c0_i32_0 : i32, i32
  }
  func.func @transform_4(%arg0: i32) -> (i32, i32) {
    %c0_i32 = arith.constant 0 : i32
    %c0_i32_0 = arith.constant 0 : i32
    %c0_i32_1 = arith.constant 0 : i32
    return %c0_i32, %c0_i32_0 : i32, i32
  }
  func.func @transform_5(%arg0: i32) -> (i32, i32) {
    %c0_i32 = arith.constant 0 : i32
    %c0_i32_0 = arith.constant 0 : i32
    return %arg0, %c0_i32 : i32, i32
  }
}

module attributes {stable_mosaic.version = 11 : i64} {
  func.func @_mm_bias_sigmoid_kernel(%arg0: i32, %arg1: memref<64x256xbf16, #tpu.memory_space<vmem>>, %arg2: memref<256x128xbf16, #tpu.memory_space<vmem>>, %arg3: memref<1x128xf32, #tpu.memory_space<vmem>>, %arg4: memref<64x128xbf16, #tpu.memory_space<vmem>>) attributes {dimension_semantics = [#tpu.dimension_semantics<parallel>], iteration_bounds = array<i64: 2>, scalar_prefetch = 0 : i64, scratch_operands = 0 : i64, tpu.core_type = #tpu.core_type<tc>, window_params = [{transform_indices = @transform_0, window_bounds = array<i64: 64, 256>}, {pipeline_mode = #tpu.pipeline_mode<synchronous>, transform_indices = @transform_1, window_bounds = array<i64: 256, 128>}, {pipeline_mode = #tpu.pipeline_mode<synchronous>, transform_indices = @transform_2, window_bounds = array<i64: 1, 128>}, {transform_indices = @transform_3, window_bounds = array<i64: 64, 128>}]} {
    %c0 = arith.constant 0 : index
    %c0_0 = arith.constant 0 : index
    %0 = vector.load %arg1[%c0, %c0_0] : memref<64x256xbf16, #tpu.memory_space<vmem>>, vector<64x256xbf16>
    %c0_1 = arith.constant 0 : index
    %c0_2 = arith.constant 0 : index
    %1 = vector.load %arg2[%c0_1, %c0_2] : memref<256x128xbf16, #tpu.memory_space<vmem>>, vector<256x128xbf16>
    %cst = arith.constant dense<0.000000e+00> : vector<64x128xf32>
    %2 = tpu.matmul %0, %1, %cst {dimension_numbers = #tpu.dot_dimension_numbers<[1], [0], [0], [1], [0, 0, 1, 1], [], []>} : vector<64x256xbf16>, vector<256x128xbf16>, vector<64x128xf32> -> vector<64x128xf32>
    %c0_3 = arith.constant 0 : index
    %c0_4 = arith.constant 0 : index
    %3 = vector.load %arg3[%c0_3, %c0_4] : memref<1x128xf32, #tpu.memory_space<vmem>>, vector<1x128xf32>
    %4 = vector.broadcast %3 : vector<1x128xf32> to vector<64x128xf32>
    %5 = arith.addf %2, %4 : vector<64x128xf32>
    %6 = arith.negf %5 : vector<64x128xf32>
    %7 = math.exp %6 : vector<64x128xf32>
    %cst_5 = arith.constant 1.000000e+00 : f32
    %8 = vector.broadcast %cst_5 : f32 to vector<64x128xf32>
    %9 = arith.addf %8, %7 : vector<64x128xf32>
    %10 = arith.divf %8, %9 : vector<64x128xf32>
    %11 = arith.truncf %10 : vector<64x128xf32> to vector<64x128xbf16>
    %c0_6 = arith.constant 0 : index
    %c0_7 = arith.constant 0 : index
    %12 = vector.load %arg4[%c0_6, %c0_7] : memref<64x128xbf16, #tpu.memory_space<vmem>>, vector<64x128xbf16>
    tpu.vector_store %arg4[%c0_6, %c0_7], %11 {strides = array<i32>} : memref<64x128xbf16, #tpu.memory_space<vmem>>, vector<64x128xbf16>,
    return
  }
  func.func @transform_0(%arg0: i32) -> (i32, i32) {
    %c0_i32 = arith.constant 0 : i32
    %c0_i32_0 = arith.constant 0 : i32
    return %arg0, %c0_i32 : i32, i32
  }
  func.func @transform_1(%arg0: i32) -> (i32, i32) {
    %c0_i32 = arith.constant 0 : i32
    %c0_i32_0 = arith.constant 0 : i32
    %c0_i32_1 = arith.constant 0 : i32
    return %c0_i32, %c0_i32_0 : i32, i32
  }
  func.func @transform_2(%arg0: i32) -> (i32, i32) {
    %c0_i32 = arith.constant 0 : i32
    %c0_i32_0 = arith.constant 0 : i32
    %c0_i32_1 = arith.constant 0 : i32
    return %c0_i32, %c0_i32_0 : i32, i32
  }
  func.func @transform_3(%arg0: i32) -> (i32, i32) {
    %c0_i32 = arith.constant 0 : i32
    %c0_i32_0 = arith.constant 0 : i32
    return %arg0, %c0_i32 : i32, i32
  }
}

</mosaic_0001>

<llo_original>
// kernel: _lambda_.3
$region0: #{_lambda_.3}
  #allocation0 [shape = 'u32[]', space=smem, size = 0x4, offset = 0x4, fixed_abs, tag = 'smem constant byte address 0x4 - core index']
  #allocation1 [shape = 'u32[144,128]{1,0:T(1,128)}', space=vmem, size = 0x12000, scoped, tag = 'internal scratch']
  %s0 = inlined_call_operand.vmem [shape: bf16[416,128], index: 0, kind: input, shape index: {}]
  %s1 = inlined_call_operand.vmem [shape: bf16[128,128], index: 1, kind: input, shape index: {}]
  %s2 = inlined_call_operand.vmem [shape: f32[1,128], index: 2, kind: input, shape index: {}]
  %s3 = inlined_call_operand.vmem [shape: bf16[416,128], index: 3, kind: output, shape index: {}]
  %s4 = sld [smem:[#allocation0]]
  $region45: #{_lambda_.3} parent=0
    _
  %s6 = ssub.s32 1, %s4
  %s7 = scalar_select 0, %s6, %s4
  loop: start=0, step=1, limit=4
  $region2: #{_lambda_.3} parent=0 // loop_pre_header
    _
  $region3: #{_lambda_.3} parent=0 // loop_header
    %s9 = sphi 0, %s13
    %p10 = scmp.ge.s32.totalorder %s9, 4
    %s19 = sphi 0, %s21
    %s22 = sphi 0, %s19
    %s23 = sphi 0, %s22
    %s39 = sphi 0, %s23
    %s43 = sphi 0, %s43
    %s45 = sphi 0, %s43
    %s46 = sphi 0, %s45
    %s60 = sphi 0, %s46
    %s64 = sphi 0, %s64
    %s66 = sphi 0, %s64
    %s67 = sphi 0, %s66
    %s81 = sphi 0, %s67
    %s87 = sphi 0, %s89
    %s90 = sphi 0, %s87
    %s91 = sphi 0, %s90
    %s107 = sphi 0, %s91
  $region4: #{_lambda_.3} parent=0 // loop_header_branch
    %12 = sbr.rel (%p10) target = $region8
  $region5: #{_lambda_.3} parent=0 // loop_body
    %s14 = ssub.s32 %s9, 1
    %s15 = ssub.s32 %s9, 2
    %s16 = sadd.s32 %s9, 1
    %s17 = ssub.s32 %s9, %s16
    %p18 = scmp.eq.s32.totalorder %s17, 0
    %s20 = sadd.s32 %s19, 1
    %s21 = scalar_select %p18, %s19, %s20
    %p24 = pneg %p18
    %p25 = scmp.eq.s32.totalorder %s9, 1
    %p26 = por %p24, %p25
    %p27 = scmp.ne.s32.totalorder %s19, %s22
    %p28 = scmp.eq.s32.totalorder %s9, 0
    %p29 = por %p27, %p28
    %p30 = scmp.ne.s32.totalorder %s19, %s22
    %p31 = scmp.eq.s32.totalorder %s14, 1
    %p32 = por %p30, %p31
    %p33 = scmp.ne.s32.totalorder %s22, %s23
    %p34 = scmp.eq.s32.totalorder %s14, 0
    %p35 = por %p33, %p34
    %p36 = scmp.ne.s32.totalorder %s22, %s23
    %p37 = scmp.eq.s32.totalorder %s15, 1
    %p38 = por %p36, %p37
    %p40 = scmp.ne.s32.totalorder %s23, %s39
    %p41 = scmp.eq.s32.totalorder %s15, 0
    %p42 = por %p40, %p41
    %s44 = sadd.s32 %s43, 1
    %p47 = scmp.eq.s32.totalorder %s9, 1
    %p48 = scmp.ne.s32.totalorder %s43, %s45
    %p49 = scmp.eq.s32.totalorder %s9, 0
    %p50 = por %p48, %p49
    %p51 = scmp.ne.s32.totalorder %s43, %s45
    %p52 = scmp.eq.s32.totalorder %s14, 1
    %p53 = por %p51, %p52
    %p54 = scmp.ne.s32.totalorder %s45, %s46
    %p55 = scmp.eq.s32.totalorder %s14, 0
    %p56 = por %p54, %p55
    %p57 = scmp.ne.s32.totalorder %s45, %s46
    %p58 = scmp.eq.s32.totalorder %s15, 1
    %p59 = por %p57, %p58
    %p61 = scmp.ne.s32.totalorder %s46, %s60
    %p62 = scmp.eq.s32.totalorder %s15, 0
    %p63 = por %p61, %p62
    %s65 = sadd.s32 %s64, 1
    %p68 = scmp.eq.s32.totalorder %s9, 1
    %p69 = scmp.ne.s32.totalorder %s64, %s66
    %p70 = scmp.eq.s32.totalorder %s9, 0
    %p71 = por %p69, %p70
    %p72 = scmp.ne.s32.totalorder %s64, %s66
    %p73 = scmp.eq.s32.totalorder %s14, 1
    %p74 = por %p72, %p73
    %p75 = scmp.ne.s32.totalorder %s66, %s67
    %p76 = scmp.eq.s32.totalorder %s14, 0
    %p77 = por %p75, %p76
    %p78 = scmp.ne.s32.totalorder %s66, %s67
    %p79 = scmp.eq.s32.totalorder %s15, 1
    %p80 = por %p78, %p79
    %p82 = scmp.ne.s32.totalorder %s67, %s81
    %p83 = scmp.eq.s32.totalorder %s15, 0
    %p84 = por %p82, %p83
    %s85 = ssub.s32 %s9, %s16
    %p86 = scmp.eq.s32.totalorder %s85, 0
    %s88 = sadd.s32 %s87, 1
    %s89 = scalar_select %p86, %s87, %s88
    %p92 = pneg %p86
    %p93 = scmp.eq.s32.totalorder %s9, 1
    %p94 = por %p92, %p93
    %p95 = scmp.ne.s32.totalorder %s87, %s90
    %p96 = scmp.eq.s32.totalorder %s9, 0
    %p97 = por %p95, %p96
    %p98 = scmp.ne.s32.totalorder %s87, %s90
    %p99 = scmp.eq.s32.totalorder %s14, 1
    %p100 = por %p98, %p99
    %p101 = scmp.ne.s32.totalorder %s90, %s91
    %p102 = scmp.eq.s32.totalorder %s14, 0
    %p103 = por %p101, %p102
    %p104 = scmp.ne.s32.totalorder %s90, %s91
    %p105 = scmp.eq.s32.totalorder %s15, 1
    %p106 = por %p104, %p105
    %p108 = scmp.ne.s32.totalorder %s91, %s107
    %p109 = scmp.eq.s32.totalorder %s15, 0
    %p110 = por %p108, %p109
    %p111 = scmp.le.s32.totalorder 1, %s9
    %p112 = scmp.lt.s32.totalorder %s9, 3
    %p113 = pnand %p111, %p112
    %p114 = pneg %p113
    // Predicated region
    $region9: #{_lambda_.3} parent=5 // pred_check
      _
    $region10: #{_lambda_.3} parent=5 // pred_check_branch
      %116 = sbr.rel (%p113) target = $region12
    $region11: #{_lambda_.3} parent=5 // pred_region
      %s117 = ssub.s32 %s9, 1
      // Predicated region
      $region13: #{_lambda_.3} parent=11 // pred_check
        %p118 = pneg %p56
      $region14: #{_lambda_.3} parent=11 // pred_check_branch
        %120 = sbr.rel (%p118) target = $region16
      $region15: #{_lambda_.3} parent=11 // pred_region
        _
      $region16: #{_lambda_.3} parent=11 // pred_fallthru
        _
      // Predicated region
      $region17: #{_lambda_.3} parent=11 // pred_check
        %p121 = pneg %p77
      $region18: #{_lambda_.3} parent=11 // pred_check_branch
        %123 = sbr.rel (%p121) target = $region20
      $region19: #{_lambda_.3} parent=11 // pred_region
        _
      $region20: #{_lambda_.3} parent=11 // pred_fallthru
        _
    $region12: #{_lambda_.3} parent=5 // pred_fallthru
      _
    %p124 = scmp.lt.s32.totalorder %s9, 2
    // Predicated region
    $region21: #{_lambda_.3} parent=5 // pred_check
      %p125 = pneg %p124
    $region22: #{_lambda_.3} parent=5 // pred_check_branch
      %127 = sbr.rel (%p125) target = $region24
    $region23: #{_lambda_.3} parent=5 // pred_region
      // Predicated region
      $region25: #{_lambda_.3} parent=23 // pred_check
        %p128 = pneg %p29
      $region26: #{_lambda_.3} parent=23 // pred_check_branch
        %130 = sbr.rel (%p128) target = $region28
      $region27: #{_lambda_.3} parent=23 // pred_region
        %s131 = smul.u32 26, %s9
        %p132 = scmp.lt.s32.totalorder %s131, 51
        %s133 = scalar_select %p132, %s131, 51
        %s134 = smul.addr %s133, 4
        %s135 = scalar_lea.vmem %s0, %s134
        %s136 = smul.u32 26, %s9
      $region28: #{_lambda_.3} parent=23 // pred_fallthru
        _
    $region24: #{_lambda_.3} parent=5 // pred_fallthru
      _
    %p137 = scmp.le.s32.totalorder 1, %s9
    %p138 = scmp.lt.s32.totalorder %s9, 3
    %p139 = pnand %p137, %p138
    %p140 = pneg %p139
    // Predicated region
    $region29: #{_lambda_.3} parent=5 // pred_check
      _
    $region30: #{_lambda_.3} parent=5 // pred_check_branch
      %142 = sbr.rel (%p139) target = $region32
    $region31: #{_lambda_.3} parent=5 // pred_region
      %s143 = ssub.s32 %s9, 1
      %s144 = smul.u32 26, %s14
      %p145 = scmp.lt.s32.totalorder %s144, 51
      %s146 = scalar_select %p145, %s144, 51
      %s147 = smul.addr %s146, 4
      %s148 = scalar_lea.vmem %s0, %s147
      %p149 = pneg %p35
      %p150 = pneg %p32
      %p151 = pneg %p56
      %p152 = pneg %p53
      %p153 = pneg %p77
      %p154 = pneg %p74
      %p155 = pneg %p103
      %p156 = pneg %p100
      %s157 = smul.u32 26, %s14
      %p158 = scmp.lt.s32.totalorder %s157, 51
      %s159 = scalar_select %p158, %s157, 51
      %s160 = smul.addr %s159, 4
      %s161 = scalar_lea.vmem %s3, %s160
      %s162 = smul.u32 26, %s14
      %p163 = scmp.lt.s32.totalorder %s162, 51
      %s164 = scalar_select %p163, %s162, 51
      %s165 = smul.addr %s164, 4
      %s166 = scalar_lea.vmem %s0, %s165
      %s167 = smul.u32 26, %s14
      %s168 = smul.u32 26, %s14
      %p169 = scmp.lt.s32.totalorder %s168, 51
      %s170 = scalar_select %p169, %s168, 51
      %s171 = smul.addr %s170, 4
      %s172 = scalar_lea.vmem %s3, %s171
      %s173 = smul.u32 26, %s14
      %v175 = vld [vmem:[%s166] sm:$0xf]
      %v176 = vld [vmem:[%s166 + $0x4] sm:$0xf]
      %v177 = vld [vmem:[%s166 + $0x8] sm:$0xf]
      %v178 = vld [vmem:[%s166 + $0xc] sm:$0xf]
      %v179 = vld [vmem:[%s166 + $0x10] sm:$0xf]
      %v180 = vld [vmem:[%s166 + $0x14] sm:$0xf]
      %v181 = vld [vmem:[%s166 + $0x18] sm:$0xf]
      %v182 = vld [vmem:[%s166 + $0x1c] sm:$0xf]
      %v183 = vld [vmem:[%s166 + $0x20] sm:$0xf]
      %v184 = vld [vmem:[%s166 + $0x24] sm:$0xf]
      %v185 = vld [vmem:[%s166 + $0x28] sm:$0xf]
      %v186 = vld [vmem:[%s166 + $0x2c] sm:$0xf]
      %v187 = vld [vmem:[%s166 + $0x30] sm:$0xf]
      %v188 = vld [vmem:[%s166 + $0x34] sm:$0xf]
      %v189 = vld [vmem:[%s166 + $0x38] sm:$0xf]
      %v190 = vld [vmem:[%s166 + $0x3c] sm:$0xf]
      %v191 = vld [vmem:[%s166 + $0x40] sm:$0xf]
      %v192 = vld [vmem:[%s166 + $0x44] sm:$0xf]
      %v193 = vld [vmem:[%s166 + $0x48] sm:$0xf]
      %v194 = vld [vmem:[%s166 + $0x4c] sm:$0xf]
      %v195 = vld [vmem:[%s166 + $0x50] sm:$0xf]
      %v196 = vld [vmem:[%s166 + $0x54] sm:$0xf]
      %v197 = vld [vmem:[%s166 + $0x58] sm:$0xf]
      %v198 = vld [vmem:[%s166 + $0x5c] sm:$0xf]
      %v199 = vld [vmem:[%s166 + $0x60] sm:$0xf]
      %v200 = vld [vmem:[%s166 + $0x64] sm:$0xf]
      %v201 = vld [vmem:[%s1] sm:$0xf]
      %v202 = vld [vmem:[%s1 + $0x4] sm:$0xf]
      %v203 = vld [vmem:[%s1 + $0x8] sm:$0xf]
      %v204 = vld [vmem:[%s1 + $0xc] sm:$0xf]
      %v205 = vld [vmem:[%s1 + $0x10] sm:$0xf]
      %v206 = vld [vmem:[%s1 + $0x14] sm:$0xf]
      %v207 = vld [vmem:[%s1 + $0x18] sm:$0xf]
      %v208 = vld [vmem:[%s1 + $0x1c] sm:$0xf]
      %v209 = vld [vmem:[%s1 + $0x20] sm:$0xf]
      %v210 = vld [vmem:[%s1 + $0x24] sm:$0xf]
      %v211 = vld [vmem:[%s1 + $0x28] sm:$0xf]
      %v212 = vld [vmem:[%s1 + $0x2c] sm:$0xf]
      %v213 = vld [vmem:[%s1 + $0x30] sm:$0xf]
      %v214 = vld [vmem:[%s1 + $0x34] sm:$0xf]
      %v215 = vld [vmem:[%s1 + $0x38] sm:$0xf]
      %v216 = vld [vmem:[%s1 + $0x3c] sm:$0xf]
      %v217 = vld [vmem:[%s2] sm:$0x1]
      %v219 = vlaneseq
      %v220 = vshrl.u32 %v219, 7
      %v221 = vsub.s32 0, %v220
      %v222 = vrot.slane %v217, %v221
      %v250 = vunpack.c.l.b16 %v175
      %v251 = vunpack.c.l.b16 %v176
      %v252 = vunpack.c.l.b16 %v177
      %v253 = vunpack.c.l.b16 %v178
      %v254 = vunpack.c.l.b16 %v179
      %v255 = vunpack.c.l.b16 %v180
      %v256 = vunpack.c.l.b16 %v181
      %v257 = vunpack.c.l.b16 %v182
      %v258 = vunpack.c.l.b16 %v183
      %v259 = vunpack.c.l.b16 %v184
      %v260 = vunpack.c.l.b16 %v185
      %v261 = vunpack.c.l.b16 %v186
      %v262 = vunpack.c.l.b16 %v187
      %v263 = vunpack.c.l.b16 %v188
      %v264 = vunpack.c.l.b16 %v189
      %v265 = vunpack.c.l.b16 %v190
      %v266 = vunpack.c.l.b16 %v191
      %v267 = vunpack.c.l.b16 %v192
      %v268 = vunpack.c.l.b16 %v193
      %v269 = vunpack.c.l.b16 %v194
      %v270 = vunpack.c.l.b16 %v195
      %v271 = vunpack.c.l.b16 %v196
      %v272 = vunpack.c.l.b16 %v197
      %v273 = vunpack.c.l.b16 %v198
      %v274 = vunpack.c.l.b16 %v199
      %v275 = vunpack.c.l.b16 %v200
      %v276 = vpack.c.b16 %v251, %v250
      %v277 = vpack.c.b16 %v253, %v252
      %v278 = vpack.c.b16 %v255, %v254
      %v279 = vpack.c.b16 %v257, %v256
      %v280 = vpack.c.b16 %v259, %v258
      %v281 = vpack.c.b16 %v261, %v260
      %v282 = vpack.c.b16 %v263, %v262
      %v283 = vpack.c.b16 %v265, %v264
      %v284 = vpack.c.b16 %v267, %v266
      %v285 = vpack.c.b16 %v269, %v268
      %v286 = vpack.c.b16 %v271, %v270
      %v287 = vpack.c.b16 %v273, %v272
      %v288 = vpack.c.b16 %v275, %v274
      %v318 = vunpack.c.l.b16 %v201
      %v319 = vunpack.c.l.b16 %v202
      %v320 = vunpack.c.l.b16 %v203
      %v321 = vunpack.c.l.b16 %v204
      %v322 = vunpack.c.l.b16 %v205
      %v323 = vunpack.c.l.b16 %v206
      %v324 = vunpack.c.l.b16 %v207
      %v325 = vunpack.c.l.b16 %v208
      %v326 = vunpack.c.l.b16 %v209
      %v327 = vunpack.c.l.b16 %v210
      %v328 = vunpack.c.l.b16 %v211
      %v329 = vunpack.c.l.b16 %v212
      %v330 = vunpack.c.l.b16 %v213
      %v331 = vunpack.c.l.b16 %v214
      %v332 = vunpack.c.l.b16 %v215
      %v333 = vunpack.c.l.b16 %v216
      %v334 = vpack.c.b16 %v319, %v318
      %v335 = vpack.c.b16 %v321, %v320
      %v336 = vpack.c.b16 %v323, %v322
      %v337 = vpack.c.b16 %v325, %v324
      %v338 = vpack.c.b16 %v327, %v326
      %v339 = vpack.c.b16 %v329, %v328
      %v340 = vpack.c.b16 %v331, %v330
      %v341 = vpack.c.b16 %v333, %v332
      %350 = vmatprep.subr.bf16.mxu0 0
      %351 = vmatpush1.bf16.msra.mxu0 %v334
      %352 = vmatprep.subr.bf16.mxu0 0
      %353 = vmatpush1.bf16.msra.mxu0 %v335
      %354 = vmatprep.subr.bf16.mxu0 0
      %355 = vmatpush1.bf16.msra.mxu0 %v336
      %356 = vmatprep.subr.bf16.mxu0 0
      %357 = vmatpush1.bf16.msra.mxu0 %v337
      %358 = vmatprep.subr.bf16.mxu0 0
      %359 = vmatpush1.bf16.msra.mxu0 %v338
      %360 = vmatprep.subr.bf16.mxu0 0
      %361 = vmatpush1.bf16.msra.mxu0 %v339
      %362 = vmatprep.subr.bf16.mxu0 0
      %363 = vmatpush1.bf16.msra.mxu0 %v340
      %364 = vmatprep.subr.bf16.mxu0 0
      %365 = vmatpush1.bf16.msra.mxu0 %v341
      %366 = vmatprep.subr.bf16.mxu0 0
      %367 = vmatpush1.bf16.msra.mxu0 0
      %368 = vmatprep.subr.bf16.mxu0 0
      %369 = vmatpush1.bf16.msra.mxu0 0
      %370 = vmatprep.subr.bf16.mxu0 0
      %371 = vmatpush1.bf16.msra.mxu0 0
      %372 = vmatprep.subr.bf16.mxu0 0
      %373 = vmatpush1.bf16.msra.mxu0 0
      %374 = vmatprep.subr.bf16.mxu0 0
      %375 = vmatpush1.bf16.msra.mxu0 0
      %376 = vmatprep.subr.bf16.mxu0 0
      %377 = vmatpush1.bf16.msra.mxu0 0
      %378 = vmatprep.subr.bf16.mxu0 0
      %379 = vmatpush1.bf16.msra.mxu0 0
      %380 = vmatprep.subr.bf16.mxu0 0
      %381 = vmatpush1.bf16.msra.mxu0 0
      %382 = vmatprep.mubr.bf16.mxu0 0
      %383 = vmatmul.mubr.bf16.gmra.mrb[0].mxu0 %v276
      %v384 = vpop.f32.mrb[0].mxu0
      %v385 = vadd.f32 %v222, %v384
      %v386 = vpop.f32.mrb[0].mxu0
      %v387 = vpop.f32.mrb[0].mxu0
      %v388 = vadd.f32 %v222, %v387
      %v389 = vpop.f32.mrb[0].mxu0
      %390 = vmatprep.mubr.bf16.mxu0 0
      %391 = vmatmul.mubr.bf16.gmra.mrb[0].mxu0 %v277
      %v392 = vpop.f32.mrb[0].mxu0
      %v393 = vadd.f32 %v222, %v392
      %v394 = vpop.f32.mrb[0].mxu0
      %v395 = vpop.f32.mrb[0].mxu0
      %v396 = vadd.f32 %v222, %v395
      %v397 = vpop.f32.mrb[0].mxu0
      %398 = vmatprep.mubr.bf16.mxu0 0
      %399 = vmatmul.mubr.bf16.gmra.mrb[0].mxu0 %v278
      %v400 = vpop.f32.mrb[0].mxu0
      %v401 = vadd.f32 %v222, %v400
      %v402 = vpop.f32.mrb[0].mxu0
      %v403 = vpop.f32.mrb[0].mxu0
      %v404 = vadd.f32 %v222, %v403
      %v405 = vpop.f32.mrb[0].mxu0
      %406 = vmatprep.mubr.bf16.mxu0 0
      %407 = vmatmul.mubr.bf16.gmra.mrb[0].mxu0 %v279
      %v408 = vpop.f32.mrb[0].mxu0
      %v409 = vadd.f32 %v222, %v408
      %v410 = vpop.f32.mrb[0].mxu0
      %v411 = vpop.f32.mrb[0].mxu0
      %v412 = vadd.f32 %v222, %v411
      %v413 = vpop.f32.mrb[0].mxu0
      %414 = vmatprep.mubr.bf16.mxu0 0
      %415 = vmatmul.mubr.bf16.gmra.mrb[0].mxu0 %v280
      %v416 = vpop.f32.mrb[0].mxu0
      %v417 = vadd.f32 %v222, %v416
      %v418 = vpop.f32.mrb[0].mxu0
      %v419 = vpop.f32.mrb[0].mxu0
      %v420 = vadd.f32 %v222, %v419
      %v421 = vpop.f32.mrb[0].mxu0
      %422 = vmatprep.mubr.bf16.mxu0 0
      %423 = vmatmul.mubr.bf16.gmra.mrb[0].mxu0 %v281
      %v424 = vpop.f32.mrb[0].mxu0
      %v425 = vadd.f32 %v222, %v424
      %v426 = vpop.f32.mrb[0].mxu0
      %v427 = vpop.f32.mrb[0].mxu0
      %v428 = vadd.f32 %v222, %v427
      %v429 = vpop.f32.mrb[0].mxu0
      %430 = vmatprep.mubr.bf16.mxu0 0
      %431 = vmatmul.mubr.bf16.gmra.mrb[0].mxu0 %v282
      %v432 = vpop.f32.mrb[0].mxu0
      %v433 = vadd.f32 %v222, %v432
      %v434 = vpop.f32.mrb[0].mxu0
      %v435 = vpop.f32.mrb[0].mxu0
      %v436 = vadd.f32 %v222, %v435
      %v437 = vpop.f32.mrb[0].mxu0
      %438 = vmatprep.mubr.bf16.mxu0 0
      %439 = vmatmul.mubr.bf16.gmra.mrb[0].mxu0 %v283
      %v440 = vpop.f32.mrb[0].mxu0
      %v441 = vadd.f32 %v222, %v440
      %v442 = vpop.f32.mrb[0].mxu0
      %v443 = vpop.f32.mrb[0].mxu0
      %v444 = vadd.f32 %v222, %v443
      %v445 = vpop.f32.mrb[0].mxu0
      %446 = vmatprep.mubr.bf16.mxu0 0
      %447 = vmatmul.mubr.bf16.gmra.mrb[0].mxu0 %v284
      %v448 = vpop.f32.mrb[0].mxu0
      %v449 = vadd.f32 %v222, %v448
      %v450 = vpop.f32.mrb[0].mxu0
      %v451 = vpop.f32.mrb[0].mxu0
      %v452 = vadd.f32 %v222, %v451
      %v453 = vpop.f32.mrb[0].mxu0
      %454 = vmatprep.mubr.bf16.mxu0 0
      %455 = vmatmul.mubr.bf16.gmra.mrb[0].mxu0 %v285
      %v456 = vpop.f32.mrb[0].mxu0
      %v457 = vadd.f32 %v222, %v456
      %v458 = vpop.f32.mrb[0].mxu0
      %v459 = vpop.f32.mrb[0].mxu0
      %v460 = vadd.f32 %v222, %v459
      %v461 = vpop.f32.mrb[0].mxu0
      %462 = vmatprep.mubr.bf16.mxu0 0
      %463 = vmatmul.mubr.bf16.gmra.mrb[0].mxu0 %v286
      %v464 = vpop.f32.mrb[0].mxu0
      %v465 = vadd.f32 %v222, %v464
      %v466 = vpop.f32.mrb[0].mxu0
      %v467 = vpop.f32.mrb[0].mxu0
      %v468 = vadd.f32 %v222, %v467
      %v469 = vpop.f32.mrb[0].mxu0
      %470 = vmatprep.mubr.bf16.mxu0 0
      %471 = vmatmul.mubr.bf16.gmra.mrb[0].mxu0 %v287
      %v472 = vpop.f32.mrb[0].mxu0
      %v473 = vadd.f32 %v222, %v472
      %v474 = vpop.f32.mrb[0].mxu0
      %v475 = vpop.f32.mrb[0].mxu0
      %v476 = vadd.f32 %v222, %v475
      %v477 = vpop.f32.mrb[0].mxu0
      %478 = vmatprep.mubr.bf16.mxu0 0
      %479 = vmatmul.mubr.bf16.gmra.mrb[0].mxu0 %v288
      %v480 = vpop.f32.mrb[0].mxu0
      %v481 = vadd.f32 %v222, %v480
      %v482 = vpop.f32.mrb[0].mxu0
      %v483 = vpop.f32.mrb[0].mxu0
      %v484 = vadd.f32 %v222, %v483
      %v485 = vpop.f32.mrb[0].mxu0
      %486 = vdwg.mxu0
      %v487 = vxor.u32 %v385, 2147483648
      %v488 = vxor.u32 %v388, 2147483648
      %v489 = vxor.u32 %v393, 2147483648
      %v490 = vxor.u32 %v396, 2147483648
      %v491 = vxor.u32 %v401, 2147483648
      %v492 = vxor.u32 %v404, 2147483648
      %v493 = vxor.u32 %v409, 2147483648
      %v494 = vxor.u32 %v412, 2147483648
      %v495 = vxor.u32 %v417, 2147483648
      %v496 = vxor.u32 %v420, 2147483648
      %v497 = vxor.u32 %v425, 2147483648
      %v498 = vxor.u32 %v428, 2147483648
      %v499 = vxor.u32 %v433, 2147483648
      %v500 = vxor.u32 %v436, 2147483648
      %v501 = vxor.u32 %v441, 2147483648
      %v502 = vxor.u32 %v444, 2147483648
      %v503 = vxor.u32 %v449, 2147483648
      %v504 = vxor.u32 %v452, 2147483648
      %v505 = vxor.u32 %v457, 2147483648
      %v506 = vxor.u32 %v460, 2147483648
      %v507 = vxor.u32 %v465, 2147483648
      %v508 = vxor.u32 %v468, 2147483648
      %v509 = vxor.u32 %v473, 2147483648
      %v510 = vxor.u32 %v476, 2147483648
      %v511 = vxor.u32 %v481, 2147483648
      %v512 = vxor.u32 %v484, 2147483648
      %v513 = vmul.f32 %v487, 1.442695
      %v514 = vpow.pop %v513
      %v515 = vmul.f32 %v488, 1.442695
      %v516 = vpow.pop %v515
      %v517 = vmul.f32 %v489, 1.442695
      %v518 = vpow.pop %v517
      %v519 = vmul.f32 %v490, 1.442695
      %v520 = vpow.pop %v519
      %v521 = vmul.f32 %v491, 1.442695
      %v522 = vpow.pop %v521
      %v523 = vmul.f32 %v492, 1.442695
      %v524 = vpow.pop %v523
      %v525 = vmul.f32 %v493, 1.442695
      %v526 = vpow.pop %v525
      %v527 = vmul.f32 %v494, 1.442695
      %v528 = vpow.pop %v527
      %v529 = vmul.f32 %v495, 1.442695
      %v530 = vpow.pop %v529
      %v531 = vmul.f32 %v496, 1.442695
      %v532 = vpow.pop %v531
      %v533 = vmul.f32 %v497, 1.442695
      %v534 = vpow.pop %v533
      %v535 = vmul.f32 %v498, 1.442695
      %v536 = vpow.pop %v535
      %v537 = vmul.f32 %v499, 1.442695
      %v538 = vpow.pop %v537
      %v539 = vmul.f32 %v500, 1.442695
      %v540 = vpow.pop %v539
      %v541 = vmul.f32 %v501, 1.442695
      %v542 = vpow.pop %v541
      %v543 = vmul.f32 %v502, 1.442695
      %v544 = vpow.pop %v543
      %v545 = vmul.f32 %v503, 1.442695
      %v546 = vpow.pop %v545
      %v547 = vmul.f32 %v504, 1.442695
      %v548 = vpow.pop %v547
      %v549 = vmul.f32 %v505, 1.442695
      %v550 = vpow.pop %v549
      %v551 = vmul.f32 %v506, 1.442695
      %v552 = vpow.pop %v551
      %v553 = vmul.f32 %v507, 1.442695
      %v554 = vpow.pop %v553
      %v555 = vmul.f32 %v508, 1.442695
      %v556 = vpow.pop %v555
      %v557 = vmul.f32 %v509, 1.442695
      %v558 = vpow.pop %v557
      %v559 = vmul.f32 %v510, 1.442695
      %v560 = vpow.pop %v559
      %v561 = vmul.f32 %v511, 1.442695
      %v562 = vpow.pop %v561
      %v563 = vmul.f32 %v512, 1.442695
      %v564 = vpow.pop %v563
      %v565 = vadd.f32 %v514, 1.0
      %v566 = vadd.f32 %v516, 1.0
      %v567 = vadd.f32 %v518, 1.0
      %v568 = vadd.f32 %v520, 1.0
      %v569 = vadd.f32 %v522, 1.0
      %v570 = vadd.f32 %v524, 1.0
      %v571 = vadd.f32 %v526, 1.0
      %v572 = vadd.f32 %v528, 1.0
      %v573 = vadd.f32 %v530, 1.0
      %v574 = vadd.f32 %v532, 1.0
      %v575 = vadd.f32 %v534, 1.0
      %v576 = vadd.f32 %v536, 1.0
      %v577 = vadd.f32 %v538, 1.0
      %v578 = vadd.f32 %v540, 1.0
      %v579 = vadd.f32 %v542, 1.0
      %v580 = vadd.f32 %v544, 1.0
      %v581 = vadd.f32 %v546, 1.0
      %v582 = vadd.f32 %v548, 1.0
      %v583 = vadd.f32 %v550, 1.0
      %v584 = vadd.f32 %v552, 1.0
      %v585 = vadd.f32 %v554, 1.0
      %v586 = vadd.f32 %v556, 1.0
      %v587 = vadd.f32 %v558, 1.0
      %v588 = vadd.f32 %v560, 1.0
      %v589 = vadd.f32 %v562, 1.0
      %v590 = vadd.f32 %v564, 1.0
      %v591 = vrcp.pop %v565
      %v592 = vmul.f32 1.0, %v591
      %v593 = vrcp.pop %v566
      %v594 = vmul.f32 1.0, %v593
      %v595 = vrcp.pop %v567
      %v596 = vmul.f32 1.0, %v595
      %v597 = vrcp.pop %v568
      %v598 = vmul.f32 1.0, %v597
      %v599 = vrcp.pop %v569
      %v600 = vmul.f32 1.0, %v599
      %v601 = vrcp.pop %v570
      %v602 = vmul.f32 1.0, %v601
      %v603 = vrcp.pop %v571
      %v604 = vmul.f32 1.0, %v603
      %v605 = vrcp.pop %v572
      %v606 = vmul.f32 1.0, %v605
      %v607 = vrcp.pop %v573
      %v608 = vmul.f32 1.0, %v607
      %v609 = vrcp.pop %v574
      %v610 = vmul.f32 1.0, %v609
      %v611 = vrcp.pop %v575
      %v612 = vmul.f32 1.0, %v611
      %v613 = vrcp.pop %v576
      %v614 = vmul.f32 1.0, %v613
      %v615 = vrcp.pop %v577
      %v616 = vmul.f32 1.0, %v615
      %v617 = vrcp.pop %v578
      %v618 = vmul.f32 1.0, %v617
      %v619 = vrcp.pop %v579
      %v620 = vmul.f32 1.0, %v619
      %v621 = vrcp.pop %v580
      %v622 = vmul.f32 1.0, %v621
      %v623 = vrcp.pop %v581
      %v624 = vmul.f32 1.0, %v623
      %v625 = vrcp.pop %v582
      %v626 = vmul.f32 1.0, %v625
      %v627 = vrcp.pop %v583
      %v628 = vmul.f32 1.0, %v627
      %v629 = vrcp.pop %v584
      %v630 = vmul.f32 1.0, %v629
      %v631 = vrcp.pop %v585
      %v632 = vmul.f32 1.0, %v631
      %v633 = vrcp.pop %v586
      %v634 = vmul.f32 1.0, %v633
      %v635 = vrcp.pop %v587
      %v636 = vmul.f32 1.0, %v635
      %v637 = vrcp.pop %v588
      %v638 = vmul.f32 1.0, %v637
      %v639 = vrcp.pop %v589
      %v640 = vmul.f32 1.0, %v639
      %v641 = vrcp.pop %v590
      %v642 = vmul.f32 1.0, %v641
      %v643 = vpack.c.bf16 %v594, %v592
      %v644 = vpack.c.bf16 %v598, %v596
      %v645 = vpack.c.bf16 %v602, %v600
      %v646 = vpack.c.bf16 %v606, %v604
      %v647 = vpack.c.bf16 %v610, %v608
      %v648 = vpack.c.bf16 %v614, %v612
      %v649 = vpack.c.bf16 %v618, %v616
      %v650 = vpack.c.bf16 %v622, %v620
      %v651 = vpack.c.bf16 %v626, %v624
      %v652 = vpack.c.bf16 %v630, %v628
      %v653 = vpack.c.bf16 %v634, %v632
      %v654 = vpack.c.bf16 %v638, %v636
      %v655 = vpack.c.bf16 %v642, %v640
      %v669 = vunpack.c.l.b16 %v643
      %v670 = vunpack.c.h.b16 %v643
      %v671 = vunpack.c.l.b16 %v644
      %v672 = vunpack.c.h.b16 %v644
      %v673 = vunpack.c.l.b16 %v645
      %v674 = vunpack.c.h.b16 %v645
      %v675 = vunpack.c.l.b16 %v646
      %v676 = vunpack.c.h.b16 %v646
      %v677 = vunpack.c.l.b16 %v647
      %v678 = vunpack.c.h.b16 %v647
      %v679 = vunpack.c.l.b16 %v648
      %v680 = vunpack.c.h.b16 %v648
      %v681 = vunpack.c.l.b16 %v649
      %v682 = vunpack.c.h.b16 %v649
      %v683 = vunpack.c.l.b16 %v650
      %v684 = vunpack.c.h.b16 %v650
      %v685 = vunpack.c.l.b16 %v651
      %v686 = vunpack.c.h.b16 %v651
      %v687 = vunpack.c.l.b16 %v652
      %v688 = vunpack.c.h.b16 %v652
      %v689 = vunpack.c.l.b16 %v653
      %v690 = vunpack.c.h.b16 %v653
      %v691 = vunpack.c.l.b16 %v654
      %v692 = vunpack.c.h.b16 %v654
      %v693 = vunpack.c.l.b16 %v655
      %v694 = vunpack.c.h.b16 %v655
      %v695 = vpack.c.b16 %v669, %v669
      %v696 = vpack.c.b16 %v670, %v670
      %v697 = vpack.c.b16 %v671, %v671
      %v698 = vpack.c.b16 %v672, %v672
      %v699 = vpack.c.b16 %v673, %v673
      %v700 = vpack.c.b16 %v674, %v674
      %v701 = vpack.c.b16 %v675, %v675
      %v702 = vpack.c.b16 %v676, %v676
      %v703 = vpack.c.b16 %v677, %v677
      %v704 = vpack.c.b16 %v678, %v678
      %v705 = vpack.c.b16 %v679, %v679
      %v706 = vpack.c.b16 %v680, %v680
      %v707 = vpack.c.b16 %v681, %v681
      %v708 = vpack.c.b16 %v682, %v682
      %v709 = vpack.c.b16 %v683, %v683
      %v710 = vpack.c.b16 %v684, %v684
      %v711 = vpack.c.b16 %v685, %v685
      %v712 = vpack.c.b16 %v686, %v686
      %v713 = vpack.c.b16 %v687, %v687
      %v714 = vpack.c.b16 %v688, %v688
      %v715 = vpack.c.b16 %v689, %v689
      %v716 = vpack.c.b16 %v690, %v690
      %v717 = vpack.c.b16 %v691, %v691
      %v718 = vpack.c.b16 %v692, %v692
      %v719 = vpack.c.b16 %v693, %v693
      %v720 = vpack.c.b16 %v694, %v694
      %747 = vst [vmem:[%s172] sm:$0xf] %v695
      %748 = vst [vmem:[%s172 + $0x4] sm:$0xf] %v696
      %749 = vst [vmem:[%s172 + $0x8] sm:$0xf] %v697
      %750 = vst [vmem:[%s172 + $0xc] sm:$0xf] %v698
      %751 = vst [vmem:[%s172 + $0x10] sm:$0xf] %v699
      %752 = vst [vmem:[%s172 + $0x14] sm:$0xf] %v700
      %753 = vst [vmem:[%s172 + $0x18] sm:$0xf] %v701
      %754 = vst [vmem:[%s172 + $0x1c] sm:$0xf] %v702
      %755 = vst [vmem:[%s172 + $0x20] sm:$0xf] %v703
      %756 = vst [vmem:[%s172 + $0x24] sm:$0xf] %v704
      %757 = vst [vmem:[%s172 + $0x28] sm:$0xf] %v705
      %758 = vst [vmem:[%s172 + $0x2c] sm:$0xf] %v706
      %759 = vst [vmem:[%s172 + $0x30] sm:$0xf] %v707
      %760 = vst [vmem:[%s172 + $0x34] sm:$0xf] %v708
      %761 = vst [vmem:[%s172 + $0x38] sm:$0xf] %v709
      %762 = vst [vmem:[%s172 + $0x3c] sm:$0xf] %v710
      %763 = vst [vmem:[%s172 + $0x40] sm:$0xf] %v711
      %764 = vst [vmem:[%s172 + $0x44] sm:$0xf] %v712
      %765 = vst [vmem:[%s172 + $0x48] sm:$0xf] %v713
      %766 = vst [vmem:[%s172 + $0x4c] sm:$0xf] %v714
      %767 = vst [vmem:[%s172 + $0x50] sm:$0xf] %v715
      %768 = vst [vmem:[%s172 + $0x54] sm:$0xf] %v716
      %769 = vst [vmem:[%s172 + $0x58] sm:$0xf] %v717
      %770 = vst [vmem:[%s172 + $0x5c] sm:$0xf] %v718
      %771 = vst [vmem:[%s172 + $0x60] sm:$0xf] %v719
      %772 = vst [vmem:[%s172 + $0x64] sm:$0xf] %v720
      %s773 = smul.u32 26, %s14
      %p774 = scmp.lt.s32.totalorder %s773, 51
      %s775 = scalar_select %p774, %s773, 51
      %s776 = smul.addr %s775, 4
      %s777 = scalar_lea.vmem %s3, %s776
      // Predicated region
      $region33: #{_lambda_.3} parent=31 // pred_check
        %p778 = pneg %p100
      $region34: #{_lambda_.3} parent=31 // pred_check_branch
        %780 = sbr.rel (%p778) target = $region36
      $region35: #{_lambda_.3} parent=31 // pred_region
        %s781 = smul.u32 26, %s14
      $region36: #{_lambda_.3} parent=31 // pred_fallthru
        _
    $region32: #{_lambda_.3} parent=5 // pred_fallthru
      _
    %p782 = scmp.le.s32.totalorder 2, %s9
    // Predicated region
    $region37: #{_lambda_.3} parent=5 // pred_check
      %p783 = pneg %p782
    $region38: #{_lambda_.3} parent=5 // pred_check_branch
      %785 = sbr.rel (%p783) target = $region40
    $region39: #{_lambda_.3} parent=5 // pred_region
      %s786 = ssub.s32 %s9, 2
      // Predicated region
      $region41: #{_lambda_.3} parent=39 // pred_check
        %p787 = pneg %p106
      $region42: #{_lambda_.3} parent=39 // pred_check_branch
        %789 = sbr.rel (%p787) target = $region44
      $region43: #{_lambda_.3} parent=39 // pred_region
        %s790 = smul.u32 26, %s15
        %p791 = scmp.lt.s32.totalorder %s790, 51
        %s792 = scalar_select %p791, %s790, 51
        %s793 = smul.addr %s792, 4
        %s794 = scalar_lea.vmem %s3, %s793
      $region44: #{_lambda_.3} parent=39 // pred_fallthru
        _
    $region40: #{_lambda_.3} parent=5 // pred_fallthru
      _
  $region6: #{_lambda_.3} parent=0 // loop_footer
    %s13 = sadd.s32 1, %s9
  $region7: #{_lambda_.3} parent=0 // loop_footer_branch
    %8 = sbr.rel target = $region3
  $region8: #{_lambda_.3} parent=0 // loop_exit
    _

// kernel: _lambda_.4
$region0: #{_lambda_.4}
  #allocation0 [shape = 'u32[]', space=smem, size = 0x4, offset = 0x4, fixed_abs, tag = 'smem constant byte address 0x4 - core index']
  #allocation1 [shape = 'u32[144,128]{1,0:T(1,128)}', space=vmem, size = 0x12000, scoped, tag = 'internal scratch']
  %s0 = inlined_call_operand.vmem [shape: bf16[128,256], index: 0, kind: input, shape index: {}]
  %s1 = inlined_call_operand.vmem [shape: bf16[256,128], index: 1, kind: input, shape index: {}]
  %s2 = inlined_call_operand.vmem [shape: f32[1,128], index: 2, kind: input, shape index: {}]
  %s3 = inlined_call_operand.vmem [shape: bf16[128,128], index: 3, kind: output, shape index: {}]
  %s4 = sld [smem:[#allocation0]]
  $region45: #{_lambda_.4} parent=0
    _
  %s6 = ssub.s32 1, %s4
  %s7 = scalar_select 0, %s6, %s4
  loop: start=0, step=1, limit=4
  $region2: #{_lambda_.4} parent=0 // loop_pre_header
    _
  $region3: #{_lambda_.4} parent=0 // loop_header
    %s9 = sphi 0, %s13
    %p10 = scmp.ge.s32.totalorder %s9, 4
    %s19 = sphi 0, %s21
    %s22 = sphi 0, %s19
    %s23 = sphi 0, %s22
    %s39 = sphi 0, %s23
    %s43 = sphi 0, %s43
    %s45 = sphi 0, %s43
    %s46 = sphi 0, %s45
    %s60 = sphi 0, %s46
    %s64 = sphi 0, %s64
    %s66 = sphi 0, %s64
    %s67 = sphi 0, %s66
    %s81 = sphi 0, %s67
    %s87 = sphi 0, %s89
    %s90 = sphi 0, %s87
    %s91 = sphi 0, %s90
    %s107 = sphi 0, %s91
  $region4: #{_lambda_.4} parent=0 // loop_header_branch
    %12 = sbr.rel (%p10) target = $region8
  $region5: #{_lambda_.4} parent=0 // loop_body
    %s14 = ssub.s32 %s9, 1
    %s15 = ssub.s32 %s9, 2
    %s16 = sadd.s32 %s9, 1
    %s17 = ssub.s32 %s9, %s16
    %p18 = scmp.eq.s32.totalorder %s17, 0
    %s20 = sadd.s32 %s19, 1
    %s21 = scalar_select %p18, %s19, %s20
    %p24 = pneg %p18
    %p25 = scmp.eq.s32.totalorder %s9, 1
    %p26 = por %p24, %p25
    %p27 = scmp.ne.s32.totalorder %s19, %s22
    %p28 = scmp.eq.s32.totalorder %s9, 0
    %p29 = por %p27, %p28
    %p30 = scmp.ne.s32.totalorder %s19, %s22
    %p31 = scmp.eq.s32.totalorder %s14, 1
    %p32 = por %p30, %p31
    %p33 = scmp.ne.s32.totalorder %s22, %s23
    %p34 = scmp.eq.s32.totalorder %s14, 0
    %p35 = por %p33, %p34
    %p36 = scmp.ne.s32.totalorder %s22, %s23
    %p37 = scmp.eq.s32.totalorder %s15, 1
    %p38 = por %p36, %p37
    %p40 = scmp.ne.s32.totalorder %s23, %s39
    %p41 = scmp.eq.s32.totalorder %s15, 0
    %p42 = por %p40, %p41
    %s44 = sadd.s32 %s43, 1
    %p47 = scmp.eq.s32.totalorder %s9, 1
    %p48 = scmp.ne.s32.totalorder %s43, %s45
    %p49 = scmp.eq.s32.totalorder %s9, 0
    %p50 = por %p48, %p49
    %p51 = scmp.ne.s32.totalorder %s43, %s45
    %p52 = scmp.eq.s32.totalorder %s14, 1
    %p53 = por %p51, %p52
    %p54 = scmp.ne.s32.totalorder %s45, %s46
    %p55 = scmp.eq.s32.totalorder %s14, 0
    %p56 = por %p54, %p55
    %p57 = scmp.ne.s32.totalorder %s45, %s46
    %p58 = scmp.eq.s32.totalorder %s15, 1
    %p59 = por %p57, %p58
    %p61 = scmp.ne.s32.totalorder %s46, %s60
    %p62 = scmp.eq.s32.totalorder %s15, 0
    %p63 = por %p61, %p62
    %s65 = sadd.s32 %s64, 1
    %p68 = scmp.eq.s32.totalorder %s9, 1
    %p69 = scmp.ne.s32.totalorder %s64, %s66
    %p70 = scmp.eq.s32.totalorder %s9, 0
    %p71 = por %p69, %p70
    %p72 = scmp.ne.s32.totalorder %s64, %s66
    %p73 = scmp.eq.s32.totalorder %s14, 1
    %p74 = por %p72, %p73
    %p75 = scmp.ne.s32.totalorder %s66, %s67
    %p76 = scmp.eq.s32.totalorder %s14, 0
    %p77 = por %p75, %p76
    %p78 = scmp.ne.s32.totalorder %s66, %s67
    %p79 = scmp.eq.s32.totalorder %s15, 1
    %p80 = por %p78, %p79
    %p82 = scmp.ne.s32.totalorder %s67, %s81
    %p83 = scmp.eq.s32.totalorder %s15, 0
    %p84 = por %p82, %p83
    %s85 = ssub.s32 %s9, %s16
    %p86 = scmp.eq.s32.totalorder %s85, 0
    %s88 = sadd.s32 %s87, 1
    %s89 = scalar_select %p86, %s87, %s88
    %p92 = pneg %p86
    %p93 = scmp.eq.s32.totalorder %s9, 1
    %p94 = por %p92, %p93
    %p95 = scmp.ne.s32.totalorder %s87, %s90
    %p96 = scmp.eq.s32.totalorder %s9, 0
    %p97 = por %p95, %p96
    %p98 = scmp.ne.s32.totalorder %s87, %s90
    %p99 = scmp.eq.s32.totalorder %s14, 1
    %p100 = por %p98, %p99
    %p101 = scmp.ne.s32.totalorder %s90, %s91
    %p102 = scmp.eq.s32.totalorder %s14, 0
    %p103 = por %p101, %p102
    %p104 = scmp.ne.s32.totalorder %s90, %s91
    %p105 = scmp.eq.s32.totalorder %s15, 1
    %p106 = por %p104, %p105
    %p108 = scmp.ne.s32.totalorder %s91, %s107
    %p109 = scmp.eq.s32.totalorder %s15, 0
    %p110 = por %p108, %p109
    %p111 = scmp.le.s32.totalorder 1, %s9
    %p112 = scmp.lt.s32.totalorder %s9, 3
    %p113 = pnand %p111, %p112
    %p114 = pneg %p113
    // Predicated region
    $region9: #{_lambda_.4} parent=5 // pred_check
      _
    $region10: #{_lambda_.4} parent=5 // pred_check_branch
      %116 = sbr.rel (%p113) target = $region12
    $region11: #{_lambda_.4} parent=5 // pred_region
      %s117 = ssub.s32 %s9, 1
      // Predicated region
      $region13: #{_lambda_.4} parent=11 // pred_check
        %p118 = pneg %p56
      $region14: #{_lambda_.4} parent=11 // pred_check_branch
        %120 = sbr.rel (%p118) target = $region16
      $region15: #{_lambda_.4} parent=11 // pred_region
        _
      $region16: #{_lambda_.4} parent=11 // pred_fallthru
        _
      // Predicated region
      $region17: #{_lambda_.4} parent=11 // pred_check
        %p121 = pneg %p77
      $region18: #{_lambda_.4} parent=11 // pred_check_branch
        %123 = sbr.rel (%p121) target = $region20
      $region19: #{_lambda_.4} parent=11 // pred_region
        _
      $region20: #{_lambda_.4} parent=11 // pred_fallthru
        _
    $region12: #{_lambda_.4} parent=5 // pred_fallthru
      _
    %p124 = scmp.lt.s32.totalorder %s9, 2
    // Predicated region
    $region21: #{_lambda_.4} parent=5 // pred_check
      %p125 = pneg %p124
    $region22: #{_lambda_.4} parent=5 // pred_check_branch
      %127 = sbr.rel (%p125) target = $region24
    $region23: #{_lambda_.4} parent=5 // pred_region
      // Predicated region
      $region25: #{_lambda_.4} parent=23 // pred_check
        %p128 = pneg %p29
      $region26: #{_lambda_.4} parent=23 // pred_check_branch
        %130 = sbr.rel (%p128) target = $region28
      $region27: #{_lambda_.4} parent=23 // pred_region
        %s131 = smul.u32 8, %s9
        %p132 = scmp.lt.s32.totalorder %s131, 15
        %s133 = scalar_select %p132, %s131, 15
        %s134 = smul.addr %s133, 2
        %s135 = smul.addr %s134, 4
        %s136 = scalar_lea.vmem %s0, %s135
        %s137 = smul.u32 8, %s9
      $region28: #{_lambda_.4} parent=23 // pred_fallthru
        _
    $region24: #{_lambda_.4} parent=5 // pred_fallthru
      _
    %p138 = scmp.le.s32.totalorder 1, %s9
    %p139 = scmp.lt.s32.totalorder %s9, 3
    %p140 = pnand %p138, %p139
    %p141 = pneg %p140
    // Predicated region
    $region29: #{_lambda_.4} parent=5 // pred_check
      _
    $region30: #{_lambda_.4} parent=5 // pred_check_branch
      %143 = sbr.rel (%p140) target = $region32
    $region31: #{_lambda_.4} parent=5 // pred_region
      %s144 = ssub.s32 %s9, 1
      %s145 = smul.u32 8, %s14
      %p146 = scmp.lt.s32.totalorder %s145, 15
      %s147 = scalar_select %p146, %s145, 15
      %s148 = smul.addr %s147, 2
      %s149 = smul.addr %s148, 4
      %s150 = scalar_lea.vmem %s0, %s149
      %p151 = pneg %p35
      %p152 = pneg %p32
      %p153 = pneg %p56
      %p154 = pneg %p53
      %p155 = pneg %p77
      %p156 = pneg %p74
      %p157 = pneg %p103
      %p158 = pneg %p100
      %s159 = smul.u32 8, %s14
      %p160 = scmp.lt.s32.totalorder %s159, 15
      %s161 = scalar_select %p160, %s159, 15
      %s162 = smul.addr %s161, 4
      %s163 = scalar_lea.vmem %s3, %s162
      %s164 = smul.u32 8, %s14
      %p165 = scmp.lt.s32.totalorder %s164, 15
      %s166 = scalar_select %p165, %s164, 15
      %s167 = smul.addr %s166, 2
      %s168 = smul.addr %s167, 4
      %s169 = scalar_lea.vmem %s0, %s168
      %s170 = smul.u32 8, %s14
      %s171 = smul.u32 8, %s14
      %p172 = scmp.lt.s32.totalorder %s171, 15
      %s173 = scalar_select %p172, %s171, 15
      %s174 = smul.addr %s173, 4
      %s175 = scalar_lea.vmem %s3, %s174
      %s176 = smul.u32 8, %s14
      %v178 = vld [vmem:[%s169] sm:$0xff]
      %v179 = vld [vmem:[%s169 + $0x8] sm:$0xff]
      %v180 = vld [vmem:[%s169 + $0x10] sm:$0xff]
      %v181 = vld [vmem:[%s169 + $0x18] sm:$0xff]
      %v182 = vld [vmem:[%s169 + $0x20] sm:$0xff]
      %v183 = vld [vmem:[%s169 + $0x28] sm:$0xff]
      %v184 = vld [vmem:[%s169 + $0x30] sm:$0xff]
      %v185 = vld [vmem:[%s169 + $0x38] sm:$0xff]
      %v186 = vld [vmem:[%s1] sm:$0xf]
      %v187 = vld [vmem:[%s1 + $0x4] sm:$0xf]
      %v188 = vld [vmem:[%s1 + $0x8] sm:$0xf]
      %v189 = vld [vmem:[%s1 + $0xc] sm:$0xf]
      %v190 = vld [vmem:[%s1 + $0x10] sm:$0xf]
      %v191 = vld [vmem:[%s1 + $0x14] sm:$0xf]
      %v192 = vld [vmem:[%s1 + $0x18] sm:$0xf]
      %v193 = vld [vmem:[%s1 + $0x1c] sm:$0xf]
      %v194 = vld [vmem:[%s1 + $0x20] sm:$0xf]
      %v195 = vld [vmem:[%s1 + $0x24] sm:$0xf]
      %v196 = vld [vmem:[%s1 + $0x28] sm:$0xf]
      %v197 = vld [vmem:[%s1 + $0x2c] sm:$0xf]
      %v198 = vld [vmem:[%s1 + $0x30] sm:$0xf]
      %v199 = vld [vmem:[%s1 + $0x34] sm:$0xf]
      %v200 = vld [vmem:[%s1 + $0x38] sm:$0xf]
      %v201 = vld [vmem:[%s1 + $0x3c] sm:$0xf]
      %v202 = vld [vmem:[%s1 + $0x40] sm:$0xf]
      %v203 = vld [vmem:[%s1 + $0x44] sm:$0xf]
      %v204 = vld [vmem:[%s1 + $0x48] sm:$0xf]
      %v205 = vld [vmem:[%s1 + $0x4c] sm:$0xf]
      %v206 = vld [vmem:[%s1 + $0x50] sm:$0xf]
      %v207 = vld [vmem:[%s1 + $0x54] sm:$0xf]
      %v208 = vld [vmem:[%s1 + $0x58] sm:$0xf]
      %v209 = vld [vmem:[%s1 + $0x5c] sm:$0xf]
      %v210 = vld [vmem:[%s1 + $0x60] sm:$0xf]
      %v211 = vld [vmem:[%s1 + $0x64] sm:$0xf]
      %v212 = vld [vmem:[%s1 + $0x68] sm:$0xf]
      %v213 = vld [vmem:[%s1 + $0x6c] sm:$0xf]
      %v214 = vld [vmem:[%s1 + $0x70] sm:$0xf]
      %v215 = vld [vmem:[%s1 + $0x74] sm:$0xf]
      %v216 = vld [vmem:[%s1 + $0x78] sm:$0xf]
      %v217 = vld [vmem:[%s1 + $0x7c] sm:$0xf]
      %v218 = vld [vmem:[%s2] sm:$0x1]
      %v220 = vlaneseq
      %v221 = vshrl.u32 %v220, 7
      %v222 = vsub.s32 0, %v221
      %v223 = vrot.slane %v218, %v222
      %v233 = vunpack.c.l.b16 %v178
      %v234 = vunpack.c.h.b16 %v178
      %v235 = vunpack.c.l.b16 %v179
      %v236 = vunpack.c.h.b16 %v179
      %v237 = vunpack.c.l.b16 %v180
      %v238 = vunpack.c.h.b16 %v180
      %v239 = vunpack.c.l.b16 %v181
      %v240 = vunpack.c.h.b16 %v181
      %v241 = vunpack.c.l.b16 %v182
      %v242 = vunpack.c.h.b16 %v182
      %v243 = vunpack.c.l.b16 %v183
      %v244 = vunpack.c.h.b16 %v183
      %v245 = vunpack.c.l.b16 %v184
      %v246 = vunpack.c.h.b16 %v184
      %v247 = vunpack.c.l.b16 %v185
      %v248 = vunpack.c.h.b16 %v185
      %v249 = vpack.c.b16 %v235, %v233
      %v250 = vpack.c.b16 %v236, %v234
      %v251 = vpack.c.b16 %v239, %v237
      %v252 = vpack.c.b16 %v240, %v238
      %v253 = vpack.c.b16 %v243, %v241
      %v254 = vpack.c.b16 %v244, %v242
      %v255 = vpack.c.b16 %v247, %v245
      %v256 = vpack.c.b16 %v248, %v246
      %v297 = vunpack.c.l.b16 %v186
      %v298 = vunpack.c.l.b16 %v187
      %v299 = vunpack.c.l.b16 %v188
      %v300 = vunpack.c.l.b16 %v189
      %v301 = vunpack.c.l.b16 %v190
      %v302 = vunpack.c.l.b16 %v191
      %v303 = vunpack.c.l.b16 %v192
      %v304 = vunpack.c.l.b16 %v193
      %v305 = vunpack.c.l.b16 %v194
      %v306 = vunpack.c.l.b16 %v195
      %v307 = vunpack.c.l.b16 %v196
      %v308 = vunpack.c.l.b16 %v197
      %v309 = vunpack.c.l.b16 %v198
      %v310 = vunpack.c.l.b16 %v199
      %v311 = vunpack.c.l.b16 %v200
      %v312 = vunpack.c.l.b16 %v201
      %v313 = vunpack.c.l.b16 %v202
      %v314 = vunpack.c.l.b16 %v203
      %v315 = vunpack.c.l.b16 %v204
      %v316 = vunpack.c.l.b16 %v205
      %v317 = vunpack.c.l.b16 %v206
      %v318 = vunpack.c.l.b16 %v207
      %v319 = vunpack.c.l.b16 %v208
      %v320 = vunpack.c.l.b16 %v209
      %v321 = vunpack.c.l.b16 %v210
      %v322 = vunpack.c.l.b16 %v211
      %v323 = vunpack.c.l.b16 %v212
      %v324 = vunpack.c.l.b16 %v213
      %v325 = vunpack.c.l.b16 %v214
      %v326 = vunpack.c.l.b16 %v215
      %v327 = vunpack.c.l.b16 %v216
      %v328 = vunpack.c.l.b16 %v217
      %v329 = vpack.c.b16 %v298, %v297
      %v330 = vpack.c.b16 %v300, %v299
      %v331 = vpack.c.b16 %v302, %v301
      %v332 = vpack.c.b16 %v304, %v303
      %v333 = vpack.c.b16 %v306, %v305
      %v334 = vpack.c.b16 %v308, %v307
      %v335 = vpack.c.b16 %v310, %v309
      %v336 = vpack.c.b16 %v312, %v311
      %v337 = vpack.c.b16 %v314, %v313
      %v338 = vpack.c.b16 %v316, %v315
      %v339 = vpack.c.b16 %v318, %v317
      %v340 = vpack.c.b16 %v320, %v319
      %v341 = vpack.c.b16 %v322, %v321
      %v342 = vpack.c.b16 %v324, %v323
      %v343 = vpack.c.b16 %v326, %v325
      %v344 = vpack.c.b16 %v328, %v327
      %361 = vmatprep.subr.bf16.mxu0 0
      %362 = vmatpush1.bf16.msra.mxu0 %v329
      %363 = vmatprep.subr.bf16.mxu0 0
      %364 = vmatpush1.bf16.msra.mxu0 %v330
      %365 = vmatprep.subr.bf16.mxu0 0
      %366 = vmatpush1.bf16.msra.mxu0 %v331
      %367 = vmatprep.subr.bf16.mxu0 0
      %368 = vmatpush1.bf16.msra.mxu0 %v332
      %369 = vmatprep.subr.bf16.mxu0 0
      %370 = vmatpush1.bf16.msra.mxu0 %v333
      %371 = vmatprep.subr.bf16.mxu0 0
      %372 = vmatpush1.bf16.msra.mxu0 %v334
      %373 = vmatprep.subr.bf16.mxu0 0
      %374 = vmatpush1.bf16.msra.mxu0 %v335
      %375 = vmatprep.subr.bf16.mxu0 0
      %376 = vmatpush1.bf16.msra.mxu0 %v336
      %377 = vmatprep.subr.bf16.mxu0 0
      %378 = vmatpush1.bf16.msra.mxu0 %v337
      %379 = vmatprep.subr.bf16.mxu0 0
      %380 = vmatpush1.bf16.msra.mxu0 %v338
      %381 = vmatprep.subr.bf16.mxu0 0
      %382 = vmatpush1.bf16.msra.mxu0 %v339
      %383 = vmatprep.subr.bf16.mxu0 0
      %384 = vmatpush1.bf16.msra.mxu0 %v340
      %385 = vmatprep.subr.bf16.mxu0 0
      %386 = vmatpush1.bf16.msra.mxu0 %v341
      %387 = vmatprep.subr.bf16.mxu0 0
      %388 = vmatpush1.bf16.msra.mxu0 %v342
      %389 = vmatprep.subr.bf16.mxu0 0
      %390 = vmatpush1.bf16.msra.mxu0 %v343
      %391 = vmatprep.subr.bf16.mxu0 0
      %392 = vmatpush1.bf16.msra.mxu0 %v344
      %393 = vmatprep.mubr.bf16.mxu0 %v250
      %394 = vmatmul.mubr.bf16.gmra.mrb[0].mxu0 %v249
      %v395 = vpop.f32.mrb[0].mxu0
      %v396 = vadd.f32 %v223, %v395
      %v397 = vpop.f32.mrb[0].mxu0
      %v398 = vpop.f32.mrb[0].mxu0
      %v399 = vadd.f32 %v223, %v398
      %v400 = vpop.f32.mrb[0].mxu0
      %401 = vmatprep.mubr.bf16.mxu0 %v252
      %402 = vmatmul.mubr.bf16.gmra.mrb[0].mxu0 %v251
      %v403 = vpop.f32.mrb[0].mxu0
      %v404 = vadd.f32 %v223, %v403
      %v405 = vpop.f32.mrb[0].mxu0
      %v406 = vpop.f32.mrb[0].mxu0
      %v407 = vadd.f32 %v223, %v406
      %v408 = vpop.f32.mrb[0].mxu0
      %409 = vmatprep.mubr.bf16.mxu0 %v254
      %410 = vmatmul.mubr.bf16.gmra.mrb[0].mxu0 %v253
      %v411 = vpop.f32.mrb[0].mxu0
      %v412 = vadd.f32 %v223, %v411
      %v413 = vpop.f32.mrb[0].mxu0
      %v414 = vpop.f32.mrb[0].mxu0
      %v415 = vadd.f32 %v223, %v414
      %v416 = vpop.f32.mrb[0].mxu0
      %417 = vmatprep.mubr.bf16.mxu0 %v256
      %418 = vmatmul.mubr.bf16.gmra.mrb[0].mxu0 %v255
      %v419 = vpop.f32.mrb[0].mxu0
      %v420 = vadd.f32 %v223, %v419
      %v421 = vpop.f32.mrb[0].mxu0
      %v422 = vpop.f32.mrb[0].mxu0
      %v423 = vadd.f32 %v223, %v422
      %v424 = vpop.f32.mrb[0].mxu0
      %425 = vdwg.mxu0
      %v426 = vxor.u32 %v396, 2147483648
      %v427 = vxor.u32 %v399, 2147483648
      %v428 = vxor.u32 %v404, 2147483648
      %v429 = vxor.u32 %v407, 2147483648
      %v430 = vxor.u32 %v412, 2147483648
      %v431 = vxor.u32 %v415, 2147483648
      %v432 = vxor.u32 %v420, 2147483648
      %v433 = vxor.u32 %v423, 2147483648
      %v434 = vmul.f32 %v426, 1.442695
      %v435 = vpow.pop %v434
      %v436 = vmul.f32 %v427, 1.442695
      %v437 = vpow.pop %v436
      %v438 = vmul.f32 %v428, 1.442695
      %v439 = vpow.pop %v438
      %v440 = vmul.f32 %v429, 1.442695
      %v441 = vpow.pop %v440
      %v442 = vmul.f32 %v430, 1.442695
      %v443 = vpow.pop %v442
      %v444 = vmul.f32 %v431, 1.442695
      %v445 = vpow.pop %v444
      %v446 = vmul.f32 %v432, 1.442695
      %v447 = vpow.pop %v446
      %v448 = vmul.f32 %v433, 1.442695
      %v449 = vpow.pop %v448
      %v450 = vadd.f32 %v435, 1.0
      %v451 = vadd.f32 %v437, 1.0
      %v452 = vadd.f32 %v439, 1.0
      %v453 = vadd.f32 %v441, 1.0
      %v454 = vadd.f32 %v443, 1.0
      %v455 = vadd.f32 %v445, 1.0
      %v456 = vadd.f32 %v447, 1.0
      %v457 = vadd.f32 %v449, 1.0
      %v458 = vrcp.pop %v450
      %v459 = vmul.f32 1.0, %v458
      %v460 = vrcp.pop %v451
      %v461 = vmul.f32 1.0, %v460
      %v462 = vrcp.pop %v452
      %v463 = vmul.f32 1.0, %v462
      %v464 = vrcp.pop %v453
      %v465 = vmul.f32 1.0, %v464
      %v466 = vrcp.pop %v454
      %v467 = vmul.f32 1.0, %v466
      %v468 = vrcp.pop %v455
      %v469 = vmul.f32 1.0, %v468
      %v470 = vrcp.pop %v456
      %v471 = vmul.f32 1.0, %v470
      %v472 = vrcp.pop %v457
      %v473 = vmul.f32 1.0, %v472
      %v474 = vpack.c.bf16 %v461, %v459
      %v475 = vpack.c.bf16 %v465, %v463
      %v476 = vpack.c.bf16 %v469, %v467
      %v477 = vpack.c.bf16 %v473, %v471
      %v482 = vunpack.c.l.b16 %v474
      %v483 = vunpack.c.h.b16 %v474
      %v484 = vunpack.c.l.b16 %v475
      %v485 = vunpack.c.h.b16 %v475
      %v486 = vunpack.c.l.b16 %v476
      %v487 = vunpack.c.h.b16 %v476
      %v488 = vunpack.c.l.b16 %v477
      %v489 = vunpack.c.h.b16 %v477
      %v490 = vpack.c.b16 %v482, %v482
      %v491 = vpack.c.b16 %v483, %v483
      %v492 = vpack.c.b16 %v484, %v484
      %v493 = vpack.c.b16 %v485, %v485
      %v494 = vpack.c.b16 %v486, %v486
      %v495 = vpack.c.b16 %v487, %v487
      %v496 = vpack.c.b16 %v488, %v488
      %v497 = vpack.c.b16 %v489, %v489
      %506 = vst [vmem:[%s175] sm:$0xf] %v490
      %507 = vst [vmem:[%s175 + $0x4] sm:$0xf] %v491
      %508 = vst [vmem:[%s175 + $0x8] sm:$0xf] %v492
      %509 = vst [vmem:[%s175 + $0xc] sm:$0xf] %v493
      %510 = vst [vmem:[%s175 + $0x10] sm:$0xf] %v494
      %511 = vst [vmem:[%s175 + $0x14] sm:$0xf] %v495
      %512 = vst [vmem:[%s175 + $0x18] sm:$0xf] %v496
      %513 = vst [vmem:[%s175 + $0x1c] sm:$0xf] %v497
      %s514 = smul.u32 8, %s14
      %p515 = scmp.lt.s32.totalorder %s514, 15
      %s516 = scalar_select %p515, %s514, 15
      %s517 = smul.addr %s516, 4
      %s518 = scalar_lea.vmem %s3, %s517
      // Predicated region
      $region33: #{_lambda_.4} parent=31 // pred_check
        %p519 = pneg %p100
      $region34: #{_lambda_.4} parent=31 // pred_check_branch
        %521 = sbr.rel (%p519) target = $region36
      $region35: #{_lambda_.4} parent=31 // pred_region
        %s522 = smul.u32 8, %s14
      $region36: #{_lambda_.4} parent=31 // pred_fallthru
        _
    $region32: #{_lambda_.4} parent=5 // pred_fallthru
      _
    %p523 = scmp.le.s32.totalorder 2, %s9
    // Predicated region
    $region37: #{_lambda_.4} parent=5 // pred_check
      %p524 = pneg %p523
    $region38: #{_lambda_.4} parent=5 // pred_check_branch
      %526 = sbr.rel (%p524) target = $region40
    $region39: #{_lambda_.4} parent=5 // pred_region
      %s527 = ssub.s32 %s9, 2
      // Predicated region
      $region41: #{_lambda_.4} parent=39 // pred_check
        %p528 = pneg %p106
      $region42: #{_lambda_.4} parent=39 // pred_check_branch
        %530 = sbr.rel (%p528) target = $region44
      $region43: #{_lambda_.4} parent=39 // pred_region
        %s531 = smul.u32 8, %s15
        %p532 = scmp.lt.s32.totalorder %s531, 15
        %s533 = scalar_select %p532, %s531, 15
        %s534 = smul.addr %s533, 4
        %s535 = scalar_lea.vmem %s3, %s534
      $region44: #{_lambda_.4} parent=39 // pred_fallthru
        _
    $region40: #{_lambda_.4} parent=5 // pred_fallthru
      _
  $region6: #{_lambda_.4} parent=0 // loop_footer
    %s13 = sadd.s32 1, %s9
  $region7: #{_lambda_.4} parent=0 // loop_footer_branch
    %8 = sbr.rel target = $region3
  $region8: #{_lambda_.4} parent=0 // loop_exit
    _

// kernel: _lambda_.5
$region0: #{_lambda_.5}
  #allocation0 [shape = 'u32[]', space=smem, size = 0x4, offset = 0x4, fixed_abs, tag = 'smem constant byte address 0x4 - core index']
  #allocation1 [shape = 'u32[144,128]{1,0:T(1,128)}', space=vmem, size = 0x12000, scoped, tag = 'internal scratch']
  %s0 = inlined_call_operand.vmem [shape: bf16[16,1664], index: 0, kind: input, shape index: {}]
  %s1 = inlined_call_operand.vmem [shape: bf16[1664,128], index: 1, kind: input, shape index: {}]
  %s2 = inlined_call_operand.vmem [shape: f32[1,128], index: 2, kind: input, shape index: {}]
  %s3 = inlined_call_operand.vmem [shape: bf16[128,128], index: 3, kind: input, shape index: {}]
  %s4 = inlined_call_operand.vmem [shape: f32[1,128], index: 4, kind: input, shape index: {}]
  %s5 = inlined_call_operand.vmem [shape: f32[16,128], index: 5, kind: output, shape index: {}]
  %s6 = sld [smem:[#allocation0]]
  $region30: #{_lambda_.5} parent=0
    _
  %s8 = ssub.s32 1, %s6
  %s9 = scalar_select 0, %s8, %s6
  // Predicated region
  $region2: #{_lambda_.5} parent=0 // pred_check
    _
  $region3: #{_lambda_.5} parent=0 // pred_check_branch
    %11 = sbr.rel (0) target = $region5
  $region4: #{_lambda_.5} parent=0 // pred_region
    _
  $region5: #{_lambda_.5} parent=0 // pred_fallthru
    _
  // Predicated region
  $region6: #{_lambda_.5} parent=0 // pred_check
    _
  $region7: #{_lambda_.5} parent=0 // pred_check_branch
    %13 = sbr.rel (0) target = $region9
  $region8: #{_lambda_.5} parent=0 // pred_region
    _
  $region9: #{_lambda_.5} parent=0 // pred_fallthru
    _
  // Predicated region
  $region10: #{_lambda_.5} parent=0 // pred_check
    _
  $region11: #{_lambda_.5} parent=0 // pred_check_branch
    %15 = sbr.rel (0) target = $region13
  $region12: #{_lambda_.5} parent=0 // pred_region
    _
  $region13: #{_lambda_.5} parent=0 // pred_fallthru
    _
  // Predicated region
  $region14: #{_lambda_.5} parent=0 // pred_check
    _
  $region15: #{_lambda_.5} parent=0 // pred_check_branch
    %17 = sbr.rel (0) target = $region17
  $region16: #{_lambda_.5} parent=0 // pred_region
    _
  $region17: #{_lambda_.5} parent=0 // pred_fallthru
    _
  // Predicated region
  $region18: #{_lambda_.5} parent=0 // pred_check
    _
  $region19: #{_lambda_.5} parent=0 // pred_check_branch
    %19 = sbr.rel (0) target = $region21
  $region20: #{_lambda_.5} parent=0 // pred_region
    _
  $region21: #{_lambda_.5} parent=0 // pred_fallthru
    _
  %v21 = vld [vmem:[%s0] sm:$0xff]
  %v22 = vld [vmem:[%s0 + $0x8] sm:$0xff]
  %v23 = vld [vmem:[%s0 + $0x10] sm:$0xff]
  %v24 = vld [vmem:[%s0 + $0x18] sm:$0xff]
  %v25 = vld [vmem:[%s0 + $0x20] sm:$0xff]
  %v26 = vld [vmem:[%s0 + $0x28] sm:$0xff]
  %v27 = vld [vmem:[%s0 + $0x30] sm:$0xf]
  %v28 = vld [vmem:[%s0 + $0x34] sm:$0xff]
  %v29 = vld [vmem:[%s0 + $0x3c] sm:$0xff]
  %v30 = vld [vmem:[%s0 + $0x44] sm:$0xff]
  %v31 = vld [vmem:[%s0 + $0x4c] sm:$0xff]
  %v32 = vld [vmem:[%s0 + $0x54] sm:$0xff]
  %v33 = vld [vmem:[%s0 + $0x5c] sm:$0xff]
  %v34 = vld [vmem:[%s0 + $0x64] sm:$0xf]
  %v35 = vld [vmem:[%s1] sm:$0xf]
  %v36 = vld [vmem:[%s1 + $0x4] sm:$0xf]
  %v37 = vld [vmem:[%s1 + $0x8] sm:$0xf]
  %v38 = vld [vmem:[%s1 + $0xc] sm:$0xf]
  %v39 = vld [vmem:[%s1 + $0x10] sm:$0xf]
  %v40 = vld [vmem:[%s1 + $0x14] sm:$0xf]
  %v41 = vld [vmem:[%s1 + $0x18] sm:$0xf]
  %v42 = vld [vmem:[%s1 + $0x1c] sm:$0xf]
  %v43 = vld [vmem:[%s1 + $0x20] sm:$0xf]
  %v44 = vld [vmem:[%s1 + $0x24] sm:$0xf]
  %v45 = vld [vmem:[%s1 + $0x28] sm:$0xf]
  %v46 = vld [vmem:[%s1 + $0x2c] sm:$0xf]
  %v47 = vld [vmem:[%s1 + $0x30] sm:$0xf]
  %v48 = vld [vmem:[%s1 + $0x34] sm:$0xf]
  %v49 = vld [vmem:[%s1 + $0x38] sm:$0xf]
  %v50 = vld [vmem:[%s1 + $0x3c] sm:$0xf]
  %v51 = vld [vmem:[%s1 + $0x40] sm:$0xf]
  %v52 = vld [vmem:[%s1 + $0x44] sm:$0xf]
  %v53 = vld [vmem:[%s1 + $0x48] sm:$0xf]
  %v54 = vld [vmem:[%s1 + $0x4c] sm:$0xf]
  %v55 = vld [vmem:[%s1 + $0x50] sm:$0xf]
  %v56 = vld [vmem:[%s1 + $0x54] sm:$0xf]
  %v57 = vld [vmem:[%s1 + $0x58] sm:$0xf]
  %v58 = vld [vmem:[%s1 + $0x5c] sm:$0xf]
  %v59 = vld [vmem:[%s1 + $0x60] sm:$0xf]
  %v60 = vld [vmem:[%s1 + $0x64] sm:$0xf]
  %v61 = vld [vmem:[%s1 + $0x68] sm:$0xf]
  %v62 = vld [vmem:[%s1 + $0x6c] sm:$0xf]
  %v63 = vld [vmem:[%s1 + $0x70] sm:$0xf]
  %v64 = vld [vmem:[%s1 + $0x74] sm:$0xf]
  %v65 = vld [vmem:[%s1 + $0x78] sm:$0xf]
  %v66 = vld [vmem:[%s1 + $0x7c] sm:$0xf]
  %v67 = vld [vmem:[%s1 + $0x80] sm:$0xf]
  %v68 = vld [vmem:[%s1 + $0x84] sm:$0xf]
  %v69 = vld [vmem:[%s1 + $0x88] sm:$0xf]
  %v70 = vld [vmem:[%s1 + $0x8c] sm:$0xf]
  %v71 = vld [vmem:[%s1 + $0x90] sm:$0xf]
  %v72 = vld [vmem:[%s1 + $0x94] sm:$0xf]
  %v73 = vld [vmem:[%s1 + $0x98] sm:$0xf]
  %v74 = vld [vmem:[%s1 + $0x9c] sm:$0xf]
  %v75 = vld [vmem:[%s1 + $0xa0] sm:$0xf]
  %v76 = vld [vmem:[%s1 + $0xa4] sm:$0xf]
  %v77 = vld [vmem:[%s1 + $0xa8] sm:$0xf]
  %v78 = vld [vmem:[%s1 + $0xac] sm:$0xf]
  %v79 = vld [vmem:[%s1 + $0xb0] sm:$0xf]
  %v80 = vld [vmem:[%s1 + $0xb4] sm:$0xf]
  %v81 = vld [vmem:[%s1 + $0xb8] sm:$0xf]
  %v82 = vld [vmem:[%s1 + $0xbc] sm:$0xf]
  %v83 = vld [vmem:[%s1 + $0xc0] sm:$0xf]
  %v84 = vld [vmem:[%s1 + $0xc4] sm:$0xf]
  %v85 = vld [vmem:[%s1 + $0xc8] sm:$0xf]
  %v86 = vld [vmem:[%s1 + $0xcc] sm:$0xf]
  %v87 = vld [vmem:[%s1 + $0xd0] sm:$0xf]
  %v88 = vld [vmem:[%s1 + $0xd4] sm:$0xf]
  %v89 = vld [vmem:[%s1 + $0xd8] sm:$0xf]
  %v90 = vld [vmem:[%s1 + $0xdc] sm:$0xf]
  %v91 = vld [vmem:[%s1 + $0xe0] sm:$0xf]
  %v92 = vld [vmem:[%s1 + $0xe4] sm:$0xf]
  %v93 = vld [vmem:[%s1 + $0xe8] sm:$0xf]
  %v94 = vld [vmem:[%s1 + $0xec] sm:$0xf]
  %v95 = vld [vmem:[%s1 + $0xf0] sm:$0xf]
  %v96 = vld [vmem:[%s1 + $0xf4] sm:$0xf]
  %v97 = vld [vmem:[%s1 + $0xf8] sm:$0xf]
  %v98 = vld [vmem:[%s1 + $0xfc] sm:$0xf]
  %v99 = vld [vmem:[%s1 + $0x100] sm:$0xf]
  %v100 = vld [vmem:[%s1 + $0x104] sm:$0xf]
  %v101 = vld [vmem:[%s1 + $0x108] sm:$0xf]
  %v102 = vld [vmem:[%s1 + $0x10c] sm:$0xf]
  %v103 = vld [vmem:[%s1 + $0x110] sm:$0xf]
  %v104 = vld [vmem:[%s1 + $0x114] sm:$0xf]
  %v105 = vld [vmem:[%s1 + $0x118] sm:$0xf]
  %v106 = vld [vmem:[%s1 + $0x11c] sm:$0xf]
  %v107 = vld [vmem:[%s1 + $0x120] sm:$0xf]
  %v108 = vld [vmem:[%s1 + $0x124] sm:$0xf]
  %v109 = vld [vmem:[%s1 + $0x128] sm:$0xf]
  %v110 = vld [vmem:[%s1 + $0x12c] sm:$0xf]
  %v111 = vld [vmem:[%s1 + $0x130] sm:$0xf]
  %v112 = vld [vmem:[%s1 + $0x134] sm:$0xf]
  %v113 = vld [vmem:[%s1 + $0x138] sm:$0xf]
  %v114 = vld [vmem:[%s1 + $0x13c] sm:$0xf]
  %v115 = vld [vmem:[%s1 + $0x140] sm:$0xf]
  %v116 = vld [vmem:[%s1 + $0x144] sm:$0xf]
  %v117 = vld [vmem:[%s1 + $0x148] sm:$0xf]
  %v118 = vld [vmem:[%s1 + $0x14c] sm:$0xf]
  %v119 = vld [vmem:[%s1 + $0x150] sm:$0xf]
  %v120 = vld [vmem:[%s1 + $0x154] sm:$0xf]
  %v121 = vld [vmem:[%s1 + $0x158] sm:$0xf]
  %v122 = vld [vmem:[%s1 + $0x15c] sm:$0xf]
  %v123 = vld [vmem:[%s1 + $0x160] sm:$0xf]
  %v124 = vld [vmem:[%s1 + $0x164] sm:$0xf]
  %v125 = vld [vmem:[%s1 + $0x168] sm:$0xf]
  %v126 = vld [vmem:[%s1 + $0x16c] sm:$0xf]
  %v127 = vld [vmem:[%s1 + $0x170] sm:$0xf]
  %v128 = vld [vmem:[%s1 + $0x174] sm:$0xf]
  %v129 = vld [vmem:[%s1 + $0x178] sm:$0xf]
  %v130 = vld [vmem:[%s1 + $0x17c] sm:$0xf]
  %v131 = vld [vmem:[%s1 + $0x180] sm:$0xf]
  %v132 = vld [vmem:[%s1 + $0x184] sm:$0xf]
  %v133 = vld [vmem:[%s1 + $0x188] sm:$0xf]
  %v134 = vld [vmem:[%s1 + $0x18c] sm:$0xf]
  %v135 = vld [vmem:[%s1 + $0x190] sm:$0xf]
  %v136 = vld [vmem:[%s1 + $0x194] sm:$0xf]
  %v137 = vld [vmem:[%s1 + $0x198] sm:$0xf]
  %v138 = vld [vmem:[%s1 + $0x19c] sm:$0xf]
  %v139 = vld [vmem:[%s1 + $0x1a0] sm:$0xf]
  %v140 = vld [vmem:[%s1 + $0x1a4] sm:$0xf]
  %v141 = vld [vmem:[%s1 + $0x1a8] sm:$0xf]
  %v142 = vld [vmem:[%s1 + $0x1ac] sm:$0xf]
  %v143 = vld [vmem:[%s1 + $0x1b0] sm:$0xf]
  %v144 = vld [vmem:[%s1 + $0x1b4] sm:$0xf]
  %v145 = vld [vmem:[%s1 + $0x1b8] sm:$0xf]
  %v146 = vld [vmem:[%s1 + $0x1bc] sm:$0xf]
  %v147 = vld [vmem:[%s1 + $0x1c0] sm:$0xf]
  %v148 = vld [vmem:[%s1 + $0x1c4] sm:$0xf]
  %v149 = vld [vmem:[%s1 + $0x1c8] sm:$0xf]
  %v150 = vld [vmem:[%s1 + $0x1cc] sm:$0xf]
  %v151 = vld [vmem:[%s1 + $0x1d0] sm:$0xf]
  %v152 = vld [vmem:[%s1 + $0x1d4] sm:$0xf]
  %v153 = vld [vmem:[%s1 + $0x1d8] sm:$0xf]
  %v154 = vld [vmem:[%s1 + $0x1dc] sm:$0xf]
  %v155 = vld [vmem:[%s1 + $0x1e0] sm:$0xf]
  %v156 = vld [vmem:[%s1 + $0x1e4] sm:$0xf]
  %v157 = vld [vmem:[%s1 + $0x1e8] sm:$0xf]
  %v158 = vld [vmem:[%s1 + $0x1ec] sm:$0xf]
  %v159 = vld [vmem:[%s1 + $0x1f0] sm:$0xf]
  %v160 = vld [vmem:[%s1 + $0x1f4] sm:$0xf]
  %v161 = vld [vmem:[%s1 + $0x1f8] sm:$0xf]
  %v162 = vld [vmem:[%s1 + $0x1fc] sm:$0xf]
  %v163 = vld [vmem:[%s1 + $0x200] sm:$0xf]
  %v164 = vld [vmem:[%s1 + $0x204] sm:$0xf]
  %v165 = vld [vmem:[%s1 + $0x208] sm:$0xf]
  %v166 = vld [vmem:[%s1 + $0x20c] sm:$0xf]
  %v167 = vld [vmem:[%s1 + $0x210] sm:$0xf]
  %v168 = vld [vmem:[%s1 + $0x214] sm:$0xf]
  %v169 = vld [vmem:[%s1 + $0x218] sm:$0xf]
  %v170 = vld [vmem:[%s1 + $0x21c] sm:$0xf]
  %v171 = vld [vmem:[%s1 + $0x220] sm:$0xf]
  %v172 = vld [vmem:[%s1 + $0x224] sm:$0xf]
  %v173 = vld [vmem:[%s1 + $0x228] sm:$0xf]
  %v174 = vld [vmem:[%s1 + $0x22c] sm:$0xf]
  %v175 = vld [vmem:[%s1 + $0x230] sm:$0xf]
  %v176 = vld [vmem:[%s1 + $0x234] sm:$0xf]
  %v177 = vld [vmem:[%s1 + $0x238] sm:$0xf]
  %v178 = vld [vmem:[%s1 + $0x23c] sm:$0xf]
  %v179 = vld [vmem:[%s1 + $0x240] sm:$0xf]
  %v180 = vld [vmem:[%s1 + $0x244] sm:$0xf]
  %v181 = vld [vmem:[%s1 + $0x248] sm:$0xf]
  %v182 = vld [vmem:[%s1 + $0x24c] sm:$0xf]
  %v183 = vld [vmem:[%s1 + $0x250] sm:$0xf]
  %v184 = vld [vmem:[%s1 + $0x254] sm:$0xf]
  %v185 = vld [vmem:[%s1 + $0x258] sm:$0xf]
  %v186 = vld [vmem:[%s1 + $0x25c] sm:$0xf]
  %v187 = vld [vmem:[%s1 + $0x260] sm:$0xf]
  %v188 = vld [vmem:[%s1 + $0x264] sm:$0xf]
  %v189 = vld [vmem:[%s1 + $0x268] sm:$0xf]
  %v190 = vld [vmem:[%s1 + $0x26c] sm:$0xf]
  %v191 = vld [vmem:[%s1 + $0x270] sm:$0xf]
  %v192 = vld [vmem:[%s1 + $0x274] sm:$0xf]
  %v193 = vld [vmem:[%s1 + $0x278] sm:$0xf]
  %v194 = vld [vmem:[%s1 + $0x27c] sm:$0xf]
  %v195 = vld [vmem:[%s1 + $0x280] sm:$0xf]
  %v196 = vld [vmem:[%s1 + $0x284] sm:$0xf]
  %v197 = vld [vmem:[%s1 + $0x288] sm:$0xf]
  %v198 = vld [vmem:[%s1 + $0x28c] sm:$0xf]
  %v199 = vld [vmem:[%s1 + $0x290] sm:$0xf]
  %v200 = vld [vmem:[%s1 + $0x294] sm:$0xf]
  %v201 = vld [vmem:[%s1 + $0x298] sm:$0xf]
  %v202 = vld [vmem:[%s1 + $0x29c] sm:$0xf]
  %v203 = vld [vmem:[%s1 + $0x2a0] sm:$0xf]
  %v204 = vld [vmem:[%s1 + $0x2a4] sm:$0xf]
  %v205 = vld [vmem:[%s1 + $0x2a8] sm:$0xf]
  %v206 = vld [vmem:[%s1 + $0x2ac] sm:$0xf]
  %v207 = vld [vmem:[%s1 + $0x2b0] sm:$0xf]
  %v208 = vld [vmem:[%s1 + $0x2b4] sm:$0xf]
  %v209 = vld [vmem:[%s1 + $0x2b8] sm:$0xf]
  %v210 = vld [vmem:[%s1 + $0x2bc] sm:$0xf]
  %v211 = vld [vmem:[%s1 + $0x2c0] sm:$0xf]
  %v212 = vld [vmem:[%s1 + $0x2c4] sm:$0xf]
  %v213 = vld [vmem:[%s1 + $0x2c8] sm:$0xf]
  %v214 = vld [vmem:[%s1 + $0x2cc] sm:$0xf]
  %v215 = vld [vmem:[%s1 + $0x2d0] sm:$0xf]
  %v216 = vld [vmem:[%s1 + $0x2d4] sm:$0xf]
  %v217 = vld [vmem:[%s1 + $0x2d8] sm:$0xf]
  %v218 = vld [vmem:[%s1 + $0x2dc] sm:$0xf]
  %v219 = vld [vmem:[%s1 + $0x2e0] sm:$0xf]
  %v220 = vld [vmem:[%s1 + $0x2e4] sm:$0xf]
  %v221 = vld [vmem:[%s1 + $0x2e8] sm:$0xf]
  %v222 = vld [vmem:[%s1 + $0x2ec] sm:$0xf]
  %v223 = vld [vmem:[%s1 + $0x2f0] sm:$0xf]
  %v224 = vld [vmem:[%s1 + $0x2f4] sm:$0xf]
  %v225 = vld [vmem:[%s1 + $0x2f8] sm:$0xf]
  %v226 = vld [vmem:[%s1 + $0x2fc] sm:$0xf]
  %v227 = vld [vmem:[%s1 + $0x300] sm:$0xf]
  %v228 = vld [vmem:[%s1 + $0x304] sm:$0xf]
  %v229 = vld [vmem:[%s1 + $0x308] sm:$0xf]
  %v230 = vld [vmem:[%s1 + $0x30c] sm:$0xf]
  %v231 = vld [vmem:[%s1 + $0x310] sm:$0xf]
  %v232 = vld [vmem:[%s1 + $0x314] sm:$0xf]
  %v233 = vld [vmem:[%s1 + $0x318] sm:$0xf]
  %v234 = vld [vmem:[%s1 + $0x31c] sm:$0xf]
  %v235 = vld [vmem:[%s1 + $0x320] sm:$0xf]
  %v236 = vld [vmem:[%s1 + $0x324] sm:$0xf]
  %v237 = vld [vmem:[%s1 + $0x328] sm:$0xf]
  %v238 = vld [vmem:[%s1 + $0x32c] sm:$0xf]
  %v239 = vld [vmem:[%s1 + $0x330] sm:$0xf]
  %v240 = vld [vmem:[%s1 + $0x334] sm:$0xf]
  %v241 = vld [vmem:[%s1 + $0x338] sm:$0xf]
  %v242 = vld [vmem:[%s1 + $0x33c] sm:$0xf]
  %v243 = vld [vmem:[%s2] sm:$0x1]
  %v245 = vlaneseq
  %v246 = vshrl.u32 %v245, 7
  %v247 = vsub.s32 0, %v246
  %v248 = vrot.slane %v243, %v247
  %v264 = vunpack.c.l.b16 %v21
  %v265 = vunpack.c.h.b16 %v21
  %v266 = vunpack.c.l.b16 %v22
  %v267 = vunpack.c.h.b16 %v22
  %v268 = vunpack.c.l.b16 %v23
  %v269 = vunpack.c.h.b16 %v23
  %v270 = vunpack.c.l.b16 %v24
  %v271 = vunpack.c.h.b16 %v24
  %v272 = vunpack.c.l.b16 %v25
  %v273 = vunpack.c.h.b16 %v25
  %v274 = vunpack.c.l.b16 %v26
  %v275 = vunpack.c.h.b16 %v26
  %v276 = vunpack.c.l.b16 %v27
  %v277 = vunpack.c.l.b16 %v28
  %v278 = vunpack.c.h.b16 %v28
  %v279 = vunpack.c.l.b16 %v29
  %v280 = vunpack.c.h.b16 %v29
  %v281 = vunpack.c.l.b16 %v30
  %v282 = vunpack.c.h.b16 %v30
  %v283 = vunpack.c.l.b16 %v31
  %v284 = vunpack.c.h.b16 %v31
  %v285 = vunpack.c.l.b16 %v32
  %v286 = vunpack.c.h.b16 %v32
  %v287 = vunpack.c.l.b16 %v33
  %v288 = vunpack.c.h.b16 %v33
  %v289 = vunpack.c.l.b16 %v34
  %v290 = vpack.c.b16 %v277, %v264
  %v291 = vpack.c.b16 %v278, %v265
  %v292 = vpack.c.b16 %v279, %v266
  %v293 = vpack.c.b16 %v280, %v267
  %v294 = vpack.c.b16 %v281, %v268
  %v295 = vpack.c.b16 %v282, %v269
  %v296 = vpack.c.b16 %v283, %v270
  %v297 = vpack.c.b16 %v284, %v271
  %v298 = vpack.c.b16 %v285, %v272
  %v299 = vpack.c.b16 %v286, %v273
  %v300 = vpack.c.b16 %v287, %v274
  %v301 = vpack.c.b16 %v288, %v275
  %v302 = vpack.c.b16 %v289, %v276
  %v524 = vunpack.c.l.b16 %v35
  %v525 = vunpack.c.l.b16 %v36
  %v526 = vunpack.c.l.b16 %v37
  %v527 = vunpack.c.l.b16 %v38
  %v528 = vunpack.c.l.b16 %v39
  %v529 = vunpack.c.l.b16 %v40
  %v530 = vunpack.c.l.b16 %v41
  %v531 = vunpack.c.l.b16 %v42
  %v532 = vunpack.c.l.b16 %v43
  %v533 = vunpack.c.l.b16 %v44
  %v534 = vunpack.c.l.b16 %v45
  %v535 = vunpack.c.l.b16 %v46
  %v536 = vunpack.c.l.b16 %v47
  %v537 = vunpack.c.l.b16 %v48
  %v538 = vunpack.c.l.b16 %v49
  %v539 = vunpack.c.l.b16 %v50
  %v540 = vunpack.c.l.b16 %v51
  %v541 = vunpack.c.l.b16 %v52
  %v542 = vunpack.c.l.b16 %v53
  %v543 = vunpack.c.l.b16 %v54
  %v544 = vunpack.c.l.b16 %v55
  %v545 = vunpack.c.l.b16 %v56
  %v546 = vunpack.c.l.b16 %v57
  %v547 = vunpack.c.l.b16 %v58
  %v548 = vunpack.c.l.b16 %v59
  %v549 = vunpack.c.l.b16 %v60
  %v550 = vunpack.c.l.b16 %v61
  %v551 = vunpack.c.l.b16 %v62
  %v552 = vunpack.c.l.b16 %v63
  %v553 = vunpack.c.l.b16 %v64
  %v554 = vunpack.c.l.b16 %v65
  %v555 = vunpack.c.l.b16 %v66
  %v556 = vunpack.c.l.b16 %v67
  %v557 = vunpack.c.l.b16 %v68
  %v558 = vunpack.c.l.b16 %v69
  %v559 = vunpack.c.l.b16 %v70
  %v560 = vunpack.c.l.b16 %v71
  %v561 = vunpack.c.l.b16 %v72
  %v562 = vunpack.c.l.b16 %v73
  %v563 = vunpack.c.l.b16 %v74
  %v564 = vunpack.c.l.b16 %v75
  %v565 = vunpack.c.l.b16 %v76
  %v566 = vunpack.c.l.b16 %v77
  %v567 = vunpack.c.l.b16 %v78
  %v568 = vunpack.c.l.b16 %v79
  %v569 = vunpack.c.l.b16 %v80
  %v570 = vunpack.c.l.b16 %v81
  %v571 = vunpack.c.l.b16 %v82
  %v572 = vunpack.c.l.b16 %v83
  %v573 = vunpack.c.l.b16 %v84
  %v574 = vunpack.c.l.b16 %v85
  %v575 = vunpack.c.l.b16 %v86
  %v576 = vunpack.c.l.b16 %v87
  %v577 = vunpack.c.l.b16 %v88
  %v578 = vunpack.c.l.b16 %v89
  %v579 = vunpack.c.l.b16 %v90
  %v580 = vunpack.c.l.b16 %v91
  %v581 = vunpack.c.l.b16 %v92
  %v582 = vunpack.c.l.b16 %v93
  %v583 = vunpack.c.l.b16 %v94
  %v584 = vunpack.c.l.b16 %v95
  %v585 = vunpack.c.l.b16 %v96
  %v586 = vunpack.c.l.b16 %v97
  %v587 = vunpack.c.l.b16 %v98
  %v588 = vunpack.c.l.b16 %v99
  %v589 = vunpack.c.l.b16 %v100
  %v590 = vunpack.c.l.b16 %v101
  %v591 = vunpack.c.l.b16 %v102
  %v592 = vunpack.c.l.b16 %v103
  %v593 = vunpack.c.l.b16 %v104
  %v594 = vunpack.c.l.b16 %v105
  %v595 = vunpack.c.l.b16 %v106
  %v596 = vunpack.c.l.b16 %v107
  %v597 = vunpack.c.l.b16 %v108
  %v598 = vunpack.c.l.b16 %v109
  %v599 = vunpack.c.l.b16 %v110
  %v600 = vunpack.c.l.b16 %v111
  %v601 = vunpack.c.l.b16 %v112
  %v602 = vunpack.c.l.b16 %v113
  %v603 = vunpack.c.l.b16 %v114
  %v604 = vunpack.c.l.b16 %v115
  %v605 = vunpack.c.l.b16 %v116
  %v606 = vunpack.c.l.b16 %v117
  %v607 = vunpack.c.l.b16 %v118
  %v608 = vunpack.c.l.b16 %v119
  %v609 = vunpack.c.l.b16 %v120
  %v610 = vunpack.c.l.b16 %v121
  %v611 = vunpack.c.l.b16 %v122
  %v612 = vunpack.c.l.b16 %v123
  %v613 = vunpack.c.l.b16 %v124
  %v614 = vunpack.c.l.b16 %v125
  %v615 = vunpack.c.l.b16 %v126
  %v616 = vunpack.c.l.b16 %v127
  %v617 = vunpack.c.l.b16 %v128
  %v618 = vunpack.c.l.b16 %v129
  %v619 = vunpack.c.l.b16 %v130
  %v620 = vunpack.c.l.b16 %v131
  %v621 = vunpack.c.l.b16 %v132
  %v622 = vunpack.c.l.b16 %v133
  %v623 = vunpack.c.l.b16 %v134
  %v624 = vunpack.c.l.b16 %v135
  %v625 = vunpack.c.l.b16 %v136
  %v626 = vunpack.c.l.b16 %v137
  %v627 = vunpack.c.l.b16 %v138
  %v628 = vunpack.c.l.b16 %v139
  %v629 = vunpack.c.l.b16 %v140
  %v630 = vunpack.c.l.b16 %v141
  %v631 = vunpack.c.l.b16 %v142
  %v632 = vunpack.c.l.b16 %v143
  %v633 = vunpack.c.l.b16 %v144
  %v634 = vunpack.c.l.b16 %v145
  %v635 = vunpack.c.l.b16 %v146
  %v636 = vunpack.c.l.b16 %v147
  %v637 = vunpack.c.l.b16 %v148
  %v638 = vunpack.c.l.b16 %v149
  %v639 = vunpack.c.l.b16 %v150
  %v640 = vunpack.c.l.b16 %v151
  %v641 = vunpack.c.l.b16 %v152
  %v642 = vunpack.c.l.b16 %v153
  %v643 = vunpack.c.l.b16 %v154
  %v644 = vunpack.c.l.b16 %v155
  %v645 = vunpack.c.l.b16 %v156
  %v646 = vunpack.c.l.b16 %v157
  %v647 = vunpack.c.l.b16 %v158
  %v648 = vunpack.c.l.b16 %v159
  %v649 = vunpack.c.l.b16 %v160
  %v650 = vunpack.c.l.b16 %v161
  %v651 = vunpack.c.l.b16 %v162
  %v652 = vunpack.c.l.b16 %v163
  %v653 = vunpack.c.l.b16 %v164
  %v654 = vunpack.c.l.b16 %v165
  %v655 = vunpack.c.l.b16 %v166
  %v656 = vunpack.c.l.b16 %v167
  %v657 = vunpack.c.l.b16 %v168
  %v658 = vunpack.c.l.b16 %v169
  %v659 = vunpack.c.l.b16 %v170
  %v660 = vunpack.c.l.b16 %v171
  %v661 = vunpack.c.l.b16 %v172
  %v662 = vunpack.c.l.b16 %v173
  %v663 = vunpack.c.l.b16 %v174
  %v664 = vunpack.c.l.b16 %v175
  %v665 = vunpack.c.l.b16 %v176
  %v666 = vunpack.c.l.b16 %v177
  %v667 = vunpack.c.l.b16 %v178
  %v668 = vunpack.c.l.b16 %v179
  %v669 = vunpack.c.l.b16 %v180
  %v670 = vunpack.c.l.b16 %v181
  %v671 = vunpack.c.l.b16 %v182
  %v672 = vunpack.c.l.b16 %v183
  %v673 = vunpack.c.l.b16 %v184
  %v674 = vunpack.c.l.b16 %v185
  %v675 = vunpack.c.l.b16 %v186
  %v676 = vunpack.c.l.b16 %v187
  %v677 = vunpack.c.l.b16 %v188
  %v678 = vunpack.c.l.b16 %v189
  %v679 = vunpack.c.l.b16 %v190
  %v680 = vunpack.c.l.b16 %v191
  %v681 = vunpack.c.l.b16 %v192
  %v682 = vunpack.c.l.b16 %v193
  %v683 = vunpack.c.l.b16 %v194
  %v684 = vunpack.c.l.b16 %v195
  %v685 = vunpack.c.l.b16 %v196
  %v686 = vunpack.c.l.b16 %v197
  %v687 = vunpack.c.l.b16 %v198
  %v688 = vunpack.c.l.b16 %v199
  %v689 = vunpack.c.l.b16 %v200
  %v690 = vunpack.c.l.b16 %v201
  %v691 = vunpack.c.l.b16 %v202
  %v692 = vunpack.c.l.b16 %v203
  %v693 = vunpack.c.l.b16 %v204
  %v694 = vunpack.c.l.b16 %v205
  %v695 = vunpack.c.l.b16 %v206
  %v696 = vunpack.c.l.b16 %v207
  %v697 = vunpack.c.l.b16 %v208
  %v698 = vunpack.c.l.b16 %v209
  %v699 = vunpack.c.l.b16 %v210
  %v700 = vunpack.c.l.b16 %v211
  %v701 = vunpack.c.l.b16 %v212
  %v702 = vunpack.c.l.b16 %v213
  %v703 = vunpack.c.l.b16 %v214
  %v704 = vunpack.c.l.b16 %v215
  %v705 = vunpack.c.l.b16 %v216
  %v706 = vunpack.c.l.b16 %v217
  %v707 = vunpack.c.l.b16 %v218
  %v708 = vunpack.c.l.b16 %v219
  %v709 = vunpack.c.l.b16 %v220
  %v710 = vunpack.c.l.b16 %v221
  %v711 = vunpack.c.l.b16 %v222
  %v712 = vunpack.c.l.b16 %v223
  %v713 = vunpack.c.l.b16 %v224
  %v714 = vunpack.c.l.b16 %v225
  %v715 = vunpack.c.l.b16 %v226
  %v716 = vunpack.c.l.b16 %v227
  %v717 = vunpack.c.l.b16 %v228
  %v718 = vunpack.c.l.b16 %v229
  %v719 = vunpack.c.l.b16 %v230
  %v720 = vunpack.c.l.b16 %v231
  %v721 = vunpack.c.l.b16 %v232
  %v722 = vunpack.c.l.b16 %v233
  %v723 = vunpack.c.l.b16 %v234
  %v724 = vunpack.c.l.b16 %v235
  %v725 = vunpack.c.l.b16 %v236
  %v726 = vunpack.c.l.b16 %v237
  %v727 = vunpack.c.l.b16 %v238
  %v728 = vunpack.c.l.b16 %v239
  %v729 = vunpack.c.l.b16 %v240
  %v730 = vunpack.c.l.b16 %v241
  %v731 = vunpack.c.l.b16 %v242
  %v732 = vpack.c.b16 %v525, %v524
  %v733 = vpack.c.b16 %v527, %v526
  %v734 = vpack.c.b16 %v529, %v528
  %v735 = vpack.c.b16 %v531, %v530
  %v736 = vpack.c.b16 %v533, %v532
  %v737 = vpack.c.b16 %v535, %v534
  %v738 = vpack.c.b16 %v537, %v536
  %v739 = vpack.c.b16 %v539, %v538
  %v740 = vpack.c.b16 %v541, %v540
  %v741 = vpack.c.b16 %v543, %v542
  %v742 = vpack.c.b16 %v545, %v544
  %v743 = vpack.c.b16 %v547, %v546
  %v744 = vpack.c.b16 %v549, %v548
  %v745 = vpack.c.b16 %v551, %v550
  %v746 = vpack.c.b16 %v553, %v552
  %v747 = vpack.c.b16 %v555, %v554
  %v748 = vpack.c.b16 %v557, %v556
  %v749 = vpack.c.b16 %v559, %v558
  %v750 = vpack.c.b16 %v561, %v560
  %v751 = vpack.c.b16 %v563, %v562
  %v752 = vpack.c.b16 %v565, %v564
  %v753 = vpack.c.b16 %v567, %v566
  %v754 = vpack.c.b16 %v569, %v568
  %v755 = vpack.c.b16 %v571, %v570
  %v756 = vpack.c.b16 %v573, %v572
  %v757 = vpack.c.b16 %v575, %v574
  %v758 = vpack.c.b16 %v577, %v576
  %v759 = vpack.c.b16 %v579, %v578
  %v760 = vpack.c.b16 %v581, %v580
  %v761 = vpack.c.b16 %v583, %v582
  %v762 = vpack.c.b16 %v585, %v584
  %v763 = vpack.c.b16 %v587, %v586
  %v764 = vpack.c.b16 %v589, %v588
  %v765 = vpack.c.b16 %v591, %v590
  %v766 = vpack.c.b16 %v593, %v592
  %v767 = vpack.c.b16 %v595, %v594
  %v768 = vpack.c.b16 %v597, %v596
  %v769 = vpack.c.b16 %v599, %v598
  %v770 = vpack.c.b16 %v601, %v600
  %v771 = vpack.c.b16 %v603, %v602
  %v772 = vpack.c.b16 %v605, %v604
  %v773 = vpack.c.b16 %v607, %v606
  %v774 = vpack.c.b16 %v609, %v608
  %v775 = vpack.c.b16 %v611, %v610
  %v776 = vpack.c.b16 %v613, %v612
  %v777 = vpack.c.b16 %v615, %v614
  %v778 = vpack.c.b16 %v617, %v616
  %v779 = vpack.c.b16 %v619, %v618
  %v780 = vpack.c.b16 %v621, %v620
  %v781 = vpack.c.b16 %v623, %v622
  %v782 = vpack.c.b16 %v625, %v624
  %v783 = vpack.c.b16 %v627, %v626
  %v784 = vpack.c.b16 %v629, %v628
  %v785 = vpack.c.b16 %v631, %v630
  %v786 = vpack.c.b16 %v633, %v632
  %v787 = vpack.c.b16 %v635, %v634
  %v788 = vpack.c.b16 %v637, %v636
  %v789 = vpack.c.b16 %v639, %v638
  %v790 = vpack.c.b16 %v641, %v640
  %v791 = vpack.c.b16 %v643, %v642
  %v792 = vpack.c.b16 %v645, %v644
  %v793 = vpack.c.b16 %v647, %v646
  %v794 = vpack.c.b16 %v649, %v648
  %v795 = vpack.c.b16 %v651, %v650
  %v796 = vpack.c.b16 %v653, %v652
  %v797 = vpack.c.b16 %v655, %v654
  %v798 = vpack.c.b16 %v657, %v656
  %v799 = vpack.c.b16 %v659, %v658
  %v800 = vpack.c.b16 %v661, %v660
  %v801 = vpack.c.b16 %v663, %v662
  %v802 = vpack.c.b16 %v665, %v664
  %v803 = vpack.c.b16 %v667, %v666
  %v804 = vpack.c.b16 %v669, %v668
  %v805 = vpack.c.b16 %v671, %v670
  %v806 = vpack.c.b16 %v673, %v672
  %v807 = vpack.c.b16 %v675, %v674
  %v808 = vpack.c.b16 %v677, %v676
  %v809 = vpack.c.b16 %v679, %v678
  %v810 = vpack.c.b16 %v681, %v680
  %v811 = vpack.c.b16 %v683, %v682
  %v812 = vpack.c.b16 %v685, %v684
  %v813 = vpack.c.b16 %v687, %v686
  %v814 = vpack.c.b16 %v689, %v688
  %v815 = vpack.c.b16 %v691, %v690
  %v816 = vpack.c.b16 %v693, %v692
  %v817 = vpack.c.b16 %v695, %v694
  %v818 = vpack.c.b16 %v697, %v696
  %v819 = vpack.c.b16 %v699, %v698
  %v820 = vpack.c.b16 %v701, %v700
  %v821 = vpack.c.b16 %v703, %v702
  %v822 = vpack.c.b16 %v705, %v704
  %v823 = vpack.c.b16 %v707, %v706
  %v824 = vpack.c.b16 %v709, %v708
  %v825 = vpack.c.b16 %v711, %v710
  %v826 = vpack.c.b16 %v713, %v712
  %v827 = vpack.c.b16 %v715, %v714
  %v828 = vpack.c.b16 %v717, %v716
  %v829 = vpack.c.b16 %v719, %v718
  %v830 = vpack.c.b16 %v721, %v720
  %v831 = vpack.c.b16 %v723, %v722
  %v832 = vpack.c.b16 %v725, %v724
  %v833 = vpack.c.b16 %v727, %v726
  %v834 = vpack.c.b16 %v729, %v728
  %v835 = vpack.c.b16 %v731, %v730
  %940 = vmatprep.subr.bf16.mxu0 0
  %941 = vmatpush1.bf16.msra.mxu0 %v732
  %942 = vmatprep.subr.bf16.mxu0 0
  %943 = vmatpush1.bf16.msra.mxu0 %v733
  %944 = vmatprep.subr.bf16.mxu0 0
  %945 = vmatpush1.bf16.msra.mxu0 %v734
  %946 = vmatprep.subr.bf16.mxu0 0
  %947 = vmatpush1.bf16.msra.mxu0 %v735
  %948 = vmatprep.subr.bf16.mxu0 0
  %949 = vmatpush1.bf16.msra.mxu0 %v736
  %950 = vmatprep.subr.bf16.mxu0 0
  %951 = vmatpush1.bf16.msra.mxu0 %v737
  %952 = vmatprep.subr.bf16.mxu0 0
  %953 = vmatpush1.bf16.msra.mxu0 %v738
  %954 = vmatprep.subr.bf16.mxu0 0
  %955 = vmatpush1.bf16.msra.mxu0 %v739
  %956 = vmatprep.subr.bf16.mxu0 0
  %957 = vmatpush1.bf16.msra.mxu0 %v740
  %958 = vmatprep.subr.bf16.mxu0 0
  %959 = vmatpush1.bf16.msra.mxu0 %v741
  %960 = vmatprep.subr.bf16.mxu0 0
  %961 = vmatpush1.bf16.msra.mxu0 %v742
  %962 = vmatprep.subr.bf16.mxu0 0
  %963 = vmatpush1.bf16.msra.mxu0 %v743
  %964 = vmatprep.subr.bf16.mxu0 0
  %965 = vmatpush1.bf16.msra.mxu0 %v744
  %966 = vmatprep.subr.bf16.mxu0 0
  %967 = vmatpush1.bf16.msra.mxu0 %v745
  %968 = vmatprep.subr.bf16.mxu0 0
  %969 = vmatpush1.bf16.msra.mxu0 %v746
  %970 = vmatprep.subr.bf16.mxu0 0
  %971 = vmatpush1.bf16.msra.mxu0 %v747
  %972 = vmatprep.mubr.bf16.mxu0 %v291
  %973 = vmatmul.mubr.bf16.gmra.mrb[0].mxu0 %v290
  %v974 = vpop.f32.mrb[0].mxu0
  %v975 = vadd.f32 %v248, %v974
  %v976 = vpop.f32.mrb[0].mxu0
  %v977 = vpop.f32.mrb[0].mxu0
  %v978 = vadd.f32 %v248, %v977
  %v979 = vpop.f32.mrb[0].mxu0
  %980 = vdwg.mxu0
  %981 = vmatprep.subr.bf16.mxu0 0
  %982 = vmatpush1.bf16.msra.mxu0 %v748
  %983 = vmatprep.subr.bf16.mxu0 0
  %984 = vmatpush1.bf16.msra.mxu0 %v749
  %985 = vmatprep.subr.bf16.mxu0 0
  %986 = vmatpush1.bf16.msra.mxu0 %v750
  %987 = vmatprep.subr.bf16.mxu0 0
  %988 = vmatpush1.bf16.msra.mxu0 %v751
  %989 = vmatprep.subr.bf16.mxu0 0
  %990 = vmatpush1.bf16.msra.mxu0 %v752
  %991 = vmatprep.subr.bf16.mxu0 0
  %992 = vmatpush1.bf16.msra.mxu0 %v753
  %993 = vmatprep.subr.bf16.mxu0 0
  %994 = vmatpush1.bf16.msra.mxu0 %v754
  %995 = vmatprep.subr.bf16.mxu0 0
  %996 = vmatpush1.bf16.msra.mxu0 %v755
  %997 = vmatprep.subr.bf16.mxu0 0
  %998 = vmatpush1.bf16.msra.mxu0 %v756
  %999 = vmatprep.subr.bf16.mxu0 0
  %1000 = vmatpush1.bf16.msra.mxu0 %v757
  %1001 = vmatprep.subr.bf16.mxu0 0
  %1002 = vmatpush1.bf16.msra.mxu0 %v758
  %1003 = vmatprep.subr.bf16.mxu0 0
  %1004 = vmatpush1.bf16.msra.mxu0 %v759
  %1005 = vmatprep.subr.bf16.mxu0 0
  %1006 = vmatpush1.bf16.msra.mxu0 %v760
  %1007 = vmatprep.subr.bf16.mxu0 0
  %1008 = vmatpush1.bf16.msra.mxu0 %v761
  %1009 = vmatprep.subr.bf16.mxu0 0
  %1010 = vmatpush1.bf16.msra.mxu0 %v762
  %1011 = vmatprep.subr.bf16.mxu0 0
  %1012 = vmatpush1.bf16.msra.mxu0 %v763
  %1013 = vmatprep.mubr.bf16.mxu0 %v293
  %1014 = vmatmul.mubr.bf16.gmra.mrb[0].mxu0 %v292
  %v1015 = vpop.f32.mrb[0].mxu0
  %v1016 = vadd.f32 %v975, %v1015
  %v1017 = vpop.f32.mrb[0].mxu0
  %v1018 = vpop.f32.mrb[0].mxu0
  %v1019 = vadd.f32 %v978, %v1018
  %v1020 = vpop.f32.mrb[0].mxu0
  %1021 = vdwg.mxu0
  %1022 = vmatprep.subr.bf16.mxu0 0
  %1023 = vmatpush1.bf16.msra.mxu0 %v764
  %1024 = vmatprep.subr.bf16.mxu0 0
  %1025 = vmatpush1.bf16.msra.mxu0 %v765
  %1026 = vmatprep.subr.bf16.mxu0 0
  %1027 = vmatpush1.bf16.msra.mxu0 %v766
  %1028 = vmatprep.subr.bf16.mxu0 0
  %1029 = vmatpush1.bf16.msra.mxu0 %v767
  %1030 = vmatprep.subr.bf16.mxu0 0
  %1031 = vmatpush1.bf16.msra.mxu0 %v768
  %1032 = vmatprep.subr.bf16.mxu0 0
  %1033 = vmatpush1.bf16.msra.mxu0 %v769
  %1034 = vmatprep.subr.bf16.mxu0 0
  %1035 = vmatpush1.bf16.msra.mxu0 %v770
  %1036 = vmatprep.subr.bf16.mxu0 0
  %1037 = vmatpush1.bf16.msra.mxu0 %v771
  %1038 = vmatprep.subr.bf16.mxu0 0
  %1039 = vmatpush1.bf16.msra.mxu0 %v772
  %1040 = vmatprep.subr.bf16.mxu0 0
  %1041 = vmatpush1.bf16.msra.mxu0 %v773
  %1042 = vmatprep.subr.bf16.mxu0 0
  %1043 = vmatpush1.bf16.msra.mxu0 %v774
  %1044 = vmatprep.subr.bf16.mxu0 0
  %1045 = vmatpush1.bf16.msra.mxu0 %v775
  %1046 = vmatprep.subr.bf16.mxu0 0
  %1047 = vmatpush1.bf16.msra.mxu0 %v776
  %1048 = vmatprep.subr.bf16.mxu0 0
  %1049 = vmatpush1.bf16.msra.mxu0 %v777
  %1050 = vmatprep.subr.bf16.mxu0 0
  %1051 = vmatpush1.bf16.msra.mxu0 %v778
  %1052 = vmatprep.subr.bf16.mxu0 0
  %1053 = vmatpush1.bf16.msra.mxu0 %v779
  %1054 = vmatprep.mubr.bf16.mxu0 %v295
  %1055 = vmatmul.mubr.bf16.gmra.mrb[0].mxu0 %v294
  %v1056 = vpop.f32.mrb[0].mxu0
  %v1057 = vadd.f32 %v1016, %v1056
  %v1058 = vpop.f32.mrb[0].mxu0
  %v1059 = vpop.f32.mrb[0].mxu0
  %v1060 = vadd.f32 %v1019, %v1059
  %v1061 = vpop.f32.mrb[0].mxu0
  %1062 = vdwg.mxu0
  %1063 = vmatprep.subr.bf16.mxu0 0
  %1064 = vmatpush1.bf16.msra.mxu0 %v780
  %1065 = vmatprep.subr.bf16.mxu0 0
  %1066 = vmatpush1.bf16.msra.mxu0 %v781
  %1067 = vmatprep.subr.bf16.mxu0 0
  %1068 = vmatpush1.bf16.msra.mxu0 %v782
  %1069 = vmatprep.subr.bf16.mxu0 0
  %1070 = vmatpush1.bf16.msra.mxu0 %v783
  %1071 = vmatprep.subr.bf16.mxu0 0
  %1072 = vmatpush1.bf16.msra.mxu0 %v784
  %1073 = vmatprep.subr.bf16.mxu0 0
  %1074 = vmatpush1.bf16.msra.mxu0 %v785
  %1075 = vmatprep.subr.bf16.mxu0 0
  %1076 = vmatpush1.bf16.msra.mxu0 %v786
  %1077 = vmatprep.subr.bf16.mxu0 0
  %1078 = vmatpush1.bf16.msra.mxu0 %v787
  %1079 = vmatprep.subr.bf16.mxu0 0
  %1080 = vmatpush1.bf16.msra.mxu0 %v788
  %1081 = vmatprep.subr.bf16.mxu0 0
  %1082 = vmatpush1.bf16.msra.mxu0 %v789
  %1083 = vmatprep.subr.bf16.mxu0 0
  %1084 = vmatpush1.bf16.msra.mxu0 %v790
  %1085 = vmatprep.subr.bf16.mxu0 0
  %1086 = vmatpush1.bf16.msra.mxu0 %v791
  %1087 = vmatprep.subr.bf16.mxu0 0
  %1088 = vmatpush1.bf16.msra.mxu0 %v792
  %1089 = vmatprep.subr.bf16.mxu0 0
  %1090 = vmatpush1.bf16.msra.mxu0 %v793
  %1091 = vmatprep.subr.bf16.mxu0 0
  %1092 = vmatpush1.bf16.msra.mxu0 %v794
  %1093 = vmatprep.subr.bf16.mxu0 0
  %1094 = vmatpush1.bf16.msra.mxu0 %v795
  %1095 = vmatprep.mubr.bf16.mxu0 %v297
  %1096 = vmatmul.mubr.bf16.gmra.mrb[0].mxu0 %v296
  %v1097 = vpop.f32.mrb[0].mxu0
  %v1098 = vadd.f32 %v1057, %v1097
  %v1099 = vpop.f32.mrb[0].mxu0
  %v1100 = vpop.f32.mrb[0].mxu0
  %v1101 = vadd.f32 %v1060, %v1100
  %v1102 = vpop.f32.mrb[0].mxu0
  %1103 = vdwg.mxu0
  %1104 = vmatprep.subr.bf16.mxu0 0
  %1105 = vmatpush1.bf16.msra.mxu0 %v796
  %1106 = vmatprep.subr.bf16.mxu0 0
  %1107 = vmatpush1.bf16.msra.mxu0 %v797
  %1108 = vmatprep.subr.bf16.mxu0 0
  %1109 = vmatpush1.bf16.msra.mxu0 %v798
  %1110 = vmatprep.subr.bf16.mxu0 0
  %1111 = vmatpush1.bf16.msra.mxu0 %v799
  %1112 = vmatprep.subr.bf16.mxu0 0
  %1113 = vmatpush1.bf16.msra.mxu0 %v800
  %1114 = vmatprep.subr.bf16.mxu0 0
  %1115 = vmatpush1.bf16.msra.mxu0 %v801
  %1116 = vmatprep.subr.bf16.mxu0 0
  %1117 = vmatpush1.bf16.msra.mxu0 %v802
  %1118 = vmatprep.subr.bf16.mxu0 0
  %1119 = vmatpush1.bf16.msra.mxu0 %v803
  %1120 = vmatprep.subr.bf16.mxu0 0
  %1121 = vmatpush1.bf16.msra.mxu0 %v804
  %1122 = vmatprep.subr.bf16.mxu0 0
  %1123 = vmatpush1.bf16.msra.mxu0 %v805
  %1124 = vmatprep.subr.bf16.mxu0 0
  %1125 = vmatpush1.bf16.msra.mxu0 %v806
  %1126 = vmatprep.subr.bf16.mxu0 0
  %1127 = vmatpush1.bf16.msra.mxu0 %v807
  %1128 = vmatprep.subr.bf16.mxu0 0
  %1129 = vmatpush1.bf16.msra.mxu0 %v808
  %1130 = vmatprep.subr.bf16.mxu0 0
  %1131 = vmatpush1.bf16.msra.mxu0 %v809
  %1132 = vmatprep.subr.bf16.mxu0 0
  %1133 = vmatpush1.bf16.msra.mxu0 %v810
  %1134 = vmatprep.subr.bf16.mxu0 0
  %1135 = vmatpush1.bf16.msra.mxu0 %v811
  %1136 = vmatprep.mubr.bf16.mxu0 %v299
  %1137 = vmatmul.mubr.bf16.gmra.mrb[0].mxu0 %v298
  %v1138 = vpop.f32.mrb[0].mxu0
  %v1139 = vadd.f32 %v1098, %v1138
  %v1140 = vpop.f32.mrb[0].mxu0
  %v1141 = vpop.f32.mrb[0].mxu0
  %v1142 = vadd.f32 %v1101, %v1141
  %v1143 = vpop.f32.mrb[0].mxu0
  %1144 = vdwg.mxu0
  %1145 = vmatprep.subr.bf16.mxu0 0
  %1146 = vmatpush1.bf16.msra.mxu0 %v812
  %1147 = vmatprep.subr.bf16.mxu0 0
  %1148 = vmatpush1.bf16.msra.mxu0 %v813
  %1149 = vmatprep.subr.bf16.mxu0 0
  %1150 = vmatpush1.bf16.msra.mxu0 %v814
  %1151 = vmatprep.subr.bf16.mxu0 0
  %1152 = vmatpush1.bf16.msra.mxu0 %v815
  %1153 = vmatprep.subr.bf16.mxu0 0
  %1154 = vmatpush1.bf16.msra.mxu0 %v816
  %1155 = vmatprep.subr.bf16.mxu0 0
  %1156 = vmatpush1.bf16.msra.mxu0 %v817
  %1157 = vmatprep.subr.bf16.mxu0 0
  %1158 = vmatpush1.bf16.msra.mxu0 %v818
  %1159 = vmatprep.subr.bf16.mxu0 0
  %1160 = vmatpush1.bf16.msra.mxu0 %v819
  %1161 = vmatprep.subr.bf16.mxu0 0
  %1162 = vmatpush1.bf16.msra.mxu0 %v820
  %1163 = vmatprep.subr.bf16.mxu0 0
  %1164 = vmatpush1.bf16.msra.mxu0 %v821
  %1165 = vmatprep.subr.bf16.mxu0 0
  %1166 = vmatpush1.bf16.msra.mxu0 %v822
  %1167 = vmatprep.subr.bf16.mxu0 0
  %1168 = vmatpush1.bf16.msra.mxu0 %v823
  %1169 = vmatprep.subr.bf16.mxu0 0
  %1170 = vmatpush1.bf16.msra.mxu0 %v824
  %1171 = vmatprep.subr.bf16.mxu0 0
  %1172 = vmatpush1.bf16.msra.mxu0 %v825
  %1173 = vmatprep.subr.bf16.mxu0 0
  %1174 = vmatpush1.bf16.msra.mxu0 %v826
  %1175 = vmatprep.subr.bf16.mxu0 0
  %1176 = vmatpush1.bf16.msra.mxu0 %v827
  %1177 = vmatprep.mubr.bf16.mxu0 %v301
  %1178 = vmatmul.mubr.bf16.gmra.mrb[0].mxu0 %v300
  %v1179 = vpop.f32.mrb[0].mxu0
  %v1180 = vadd.f32 %v1139, %v1179
  %v1181 = vpop.f32.mrb[0].mxu0
  %v1182 = vpop.f32.mrb[0].mxu0
  %v1183 = vadd.f32 %v1142, %v1182
  %v1184 = vpop.f32.mrb[0].mxu0
  %1185 = vdwg.mxu0
  %1186 = vmatprep.subr.bf16.mxu0 0
  %1187 = vmatpush1.bf16.msra.mxu0 %v828
  %1188 = vmatprep.subr.bf16.mxu0 0
  %1189 = vmatpush1.bf16.msra.mxu0 %v829
  %1190 = vmatprep.subr.bf16.mxu0 0
  %1191 = vmatpush1.bf16.msra.mxu0 %v830
  %1192 = vmatprep.subr.bf16.mxu0 0
  %1193 = vmatpush1.bf16.msra.mxu0 %v831
  %1194 = vmatprep.subr.bf16.mxu0 0
  %1195 = vmatpush1.bf16.msra.mxu0 %v832
  %1196 = vmatprep.subr.bf16.mxu0 0
  %1197 = vmatpush1.bf16.msra.mxu0 %v833
  %1198 = vmatprep.subr.bf16.mxu0 0
  %1199 = vmatpush1.bf16.msra.mxu0 %v834
  %1200 = vmatprep.subr.bf16.mxu0 0
  %1201 = vmatpush1.bf16.msra.mxu0 %v835
  %1202 = vmatprep.subr.bf16.mxu0 0
  %1203 = vmatpush1.bf16.msra.mxu0 0
  %1204 = vmatprep.subr.bf16.mxu0 0
  %1205 = vmatpush1.bf16.msra.mxu0 0
  %1206 = vmatprep.subr.bf16.mxu0 0
  %1207 = vmatpush1.bf16.msra.mxu0 0
  %1208 = vmatprep.subr.bf16.mxu0 0
  %1209 = vmatpush1.bf16.msra.mxu0 0
  %1210 = vmatprep.subr.bf16.mxu0 0
  %1211 = vmatpush1.bf16.msra.mxu0 0
  %1212 = vmatprep.subr.bf16.mxu0 0
  %1213 = vmatpush1.bf16.msra.mxu0 0
  %1214 = vmatprep.subr.bf16.mxu0 0
  %1215 = vmatpush1.bf16.msra.mxu0 0
  %1216 = vmatprep.subr.bf16.mxu0 0
  %1217 = vmatpush1.bf16.msra.mxu0 0
  %1218 = vmatprep.mubr.bf16.mxu0 0
  %1219 = vmatmul.mubr.bf16.gmra.mrb[0].mxu0 %v302
  %v1220 = vpop.f32.mrb[0].mxu0
  %v1221 = vadd.f32 %v1180, %v1220
  %v1222 = vpop.f32.mrb[0].mxu0
  %v1223 = vpop.f32.mrb[0].mxu0
  %v1224 = vadd.f32 %v1183, %v1223
  %v1225 = vpop.f32.mrb[0].mxu0
  %1226 = vdwg.mxu0
  %v1227 = vxor.u32 %v1221, 2147483648
  %v1228 = vxor.u32 %v1224, 2147483648
  %v1229 = vmul.f32 %v1227, 1.442695
  %v1230 = vpow.pop %v1229
  %v1231 = vmul.f32 %v1228, 1.442695
  %v1232 = vpow.pop %v1231
  %v1233 = vadd.f32 %v1230, 1.0
  %v1234 = vadd.f32 %v1232, 1.0
  %v1235 = vrcp.pop %v1233
  %v1236 = vmul.f32 1.0, %v1235
  %v1237 = vrcp.pop %v1234
  %v1238 = vmul.f32 1.0, %v1237
  %v1239 = vld [vmem:[%s3] sm:$0xf]
  %v1240 = vld [vmem:[%s3 + $0x4] sm:$0xf]
  %v1241 = vld [vmem:[%s3 + $0x8] sm:$0xf]
  %v1242 = vld [vmem:[%s3 + $0xc] sm:$0xf]
  %v1243 = vld [vmem:[%s3 + $0x10] sm:$0xf]
  %v1244 = vld [vmem:[%s3 + $0x14] sm:$0xf]
  %v1245 = vld [vmem:[%s3 + $0x18] sm:$0xf]
  %v1246 = vld [vmem:[%s3 + $0x1c] sm:$0xf]
  %v1247 = vld [vmem:[%s3 + $0x20] sm:$0xf]
  %v1248 = vld [vmem:[%s3 + $0x24] sm:$0xf]
  %v1249 = vld [vmem:[%s3 + $0x28] sm:$0xf]
  %v1250 = vld [vmem:[%s3 + $0x2c] sm:$0xf]
  %v1251 = vld [vmem:[%s3 + $0x30] sm:$0xf]
  %v1252 = vld [vmem:[%s3 + $0x34] sm:$0xf]
  %v1253 = vld [vmem:[%s3 + $0x38] sm:$0xf]
  %v1254 = vld [vmem:[%s3 + $0x3c] sm:$0xf]
  %v1255 = vld [vmem:[%s4] sm:$0x1]
  %v1256 = vpack.c.bf16 %v1238, %v1236
  %v1258 = vlaneseq
  %v1259 = vshrl.u32 %v1258, 7
  %v1260 = vsub.s32 0, %v1259
  %v1261 = vrot.slane %v1255, %v1260
  %v1279 = vunpack.c.l.b16 %v1239
  %v1280 = vunpack.c.l.b16 %v1240
  %v1281 = vunpack.c.l.b16 %v1241
  %v1282 = vunpack.c.l.b16 %v1242
  %v1283 = vunpack.c.l.b16 %v1243
  %v1284 = vunpack.c.l.b16 %v1244
  %v1285 = vunpack.c.l.b16 %v1245
  %v1286 = vunpack.c.l.b16 %v1246
  %v1287 = vunpack.c.l.b16 %v1247
  %v1288 = vunpack.c.l.b16 %v1248
  %v1289 = vunpack.c.l.b16 %v1249
  %v1290 = vunpack.c.l.b16 %v1250
  %v1291 = vunpack.c.l.b16 %v1251
  %v1292 = vunpack.c.l.b16 %v1252
  %v1293 = vunpack.c.l.b16 %v1253
  %v1294 = vunpack.c.l.b16 %v1254
  %v1295 = vpack.c.b16 %v1280, %v1279
  %v1296 = vpack.c.b16 %v1282, %v1281
  %v1297 = vpack.c.b16 %v1284, %v1283
  %v1298 = vpack.c.b16 %v1286, %v1285
  %v1299 = vpack.c.b16 %v1288, %v1287
  %v1300 = vpack.c.b16 %v1290, %v1289
  %v1301 = vpack.c.b16 %v1292, %v1291
  %v1302 = vpack.c.b16 %v1294, %v1293
  %1311 = vmatprep.subr.bf16.mxu0 0
  %1312 = vmatpush1.bf16.msra.mxu0 %v1295
  %1313 = vmatprep.subr.bf16.mxu0 0
  %1314 = vmatpush1.bf16.msra.mxu0 %v1296
  %1315 = vmatprep.subr.bf16.mxu0 0
  %1316 = vmatpush1.bf16.msra.mxu0 %v1297
  %1317 = vmatprep.subr.bf16.mxu0 0
  %1318 = vmatpush1.bf16.msra.mxu0 %v1298
  %1319 = vmatprep.subr.bf16.mxu0 0
  %1320 = vmatpush1.bf16.msra.mxu0 %v1299
  %1321 = vmatprep.subr.bf16.mxu0 0
  %1322 = vmatpush1.bf16.msra.mxu0 %v1300
  %1323 = vmatprep.subr.bf16.mxu0 0
  %1324 = vmatpush1.bf16.msra.mxu0 %v1301
  %1325 = vmatprep.subr.bf16.mxu0 0
  %1326 = vmatpush1.bf16.msra.mxu0 %v1302
  %1327 = vmatprep.subr.bf16.mxu0 0
  %1328 = vmatpush1.bf16.msra.mxu0 0
  %1329 = vmatprep.subr.bf16.mxu0 0
  %1330 = vmatpush1.bf16.msra.mxu0 0
  %1331 = vmatprep.subr.bf16.mxu0 0
  %1332 = vmatpush1.bf16.msra.mxu0 0
  %1333 = vmatprep.subr.bf16.mxu0 0
  %1334 = vmatpush1.bf16.msra.mxu0 0
  %1335 = vmatprep.subr.bf16.mxu0 0
  %1336 = vmatpush1.bf16.msra.mxu0 0
  %1337 = vmatprep.subr.bf16.mxu0 0
  %1338 = vmatpush1.bf16.msra.mxu0 0
  %1339 = vmatprep.subr.bf16.mxu0 0
  %1340 = vmatpush1.bf16.msra.mxu0 0
  %1341 = vmatprep.subr.bf16.mxu0 0
  %1342 = vmatpush1.bf16.msra.mxu0 0
  %1343 = vmatprep.mubr.bf16.mxu0 0
  %1344 = vmatmul.mubr.bf16.gmra.mrb[0].mxu0 %v1256
  %v1345 = vpop.f32.mrb[0].mxu0
  %v1346 = vadd.f32 %v1261, %v1345
  %v1347 = vpop.f32.mrb[0].mxu0
  %v1348 = vpop.f32.mrb[0].mxu0
  %v1349 = vadd.f32 %v1261, %v1348
  %v1350 = vpop.f32.mrb[0].mxu0
  %1351 = vdwg.mxu0
  %1352 = vst [vmem:[%s5] sm:$0xff] %v1346
  %1353 = vst [vmem:[%s5 + $0x8] sm:$0xff] %v1349
  // Predicated region
  $region22: #{_lambda_.5} parent=0 // pred_check
    _
  $region23: #{_lambda_.5} parent=0 // pred_check_branch
    %1355 = sbr.rel (0) target = $region25
  $region24: #{_lambda_.5} parent=0 // pred_region
    _
  $region25: #{_lambda_.5} parent=0 // pred_fallthru
    _
  // Predicated region
  $region26: #{_lambda_.5} parent=0 // pred_check
    _
  $region27: #{_lambda_.5} parent=0 // pred_check_branch
    %1357 = sbr.rel (0) target = $region29
  $region28: #{_lambda_.5} parent=0 // pred_region
    _
  $region29: #{_lambda_.5} parent=0 // pred_fallthru
    _

</llo_original>
